<compile_context>
chip_gen: v5e
topology: v5e:2x2
jax: 0.10.0
libtpu: 0.0.40
codegen_flags: <defaults>
</compile_context>

<pallas_src>
import jax
import jax.numpy as jnp
from jax import lax
from jax.experimental import pallas as pl
from jax.experimental.pallas import tpu as pltpu


def _make_kernel(N, H, W, cin, cmid, cout):
    HW = H * W
    rows_per_chunk = 3 * cout  # one 3x3 kernel row (3 taps) per MXU matmul -> 48 rows, 8-aligned

    def kernel(x_ref, w1_ref, w2_ref, o_ref):
        # x_ref : (N, cin, HW)       channels-first, spatial flattened
        # w1_ref: (cmid, cin)        1x1 conv weight
        # w2_ref: (9*cout, cmid)     3x3 conv weight, taps stacked along rows (t = ky*3+kx)
        # o_ref : (N, cin+cout, HW)  torch.cat([x, conv_out], dim=channel)

        # Boundary predicates (batch independent): f32 0/1 rows, combined per tap with one
        # small multiply and applied with one broadcast multiply (no per-tap bool selects).
        pos = lax.broadcasted_iota(jnp.int32, (1, HW), 1)          # p = h*W + w
        if (W & (W - 1)) == 0:
            ww = jnp.bitwise_and(pos, W - 1)                       # w = p % W (power of 2)
        else:
            ww = pos % W
        m_top = (pos >= W).astype(jnp.float32)                     # dy == -1 valid
        m_bot = (pos < (H - 1) * W).astype(jnp.float32)            # dy == +1 valid
        m_left = (ww >= 1).astype(jnp.float32)                     # dx == -1 valid
        m_right = (ww <= W - 2).astype(jnp.float32)                # dx == +1 valid
        row_masks = (m_top, None, m_bot)                           # indexed by dy + 1
        col_masks = (m_left, None, m_right)                        # indexed by dx + 1

        w1 = w1_ref[...]                                           # (cmid, cin)

        for n in range(N):                                         # tiny unrolled batch loop
            x_n = x_ref[n]                                         # (cin, HW)

            # body: ReLU -> 1x1 conv -> ReLU   (lane-dense matmul, HW = 256 lanes)
            y = jnp.dot(w1, jnp.maximum(x_n, 0.0),
                        preferred_element_type=jnp.float32)        # (cmid, HW)
            y = jnp.maximum(y, 0.0)

            # 3x3 conv, pad 1: chunked tap matmuls (48 rows each), each chunk's tap outputs
            # are combined with XLU lane rotations + 0/1 masks before the next chunk is issued.
            acc = None
            for c in range(3):                                     # ky = c
                z_c = jnp.dot(
                    w2_ref[c * rows_per_chunk:(c + 1) * rows_per_chunk, :], y,
                    preferred_element_type=jnp.float32)            # (3*cout, HW)
                dy = c - 1
                for j in range(3):                                 # kx = j
                    dx = j - 1
                    s = dy * W + dx                                # flattened shift
                    z_t = z_c[j * cout:(j + 1) * cout, :]          # (cout, HW), aligned slice
                    if s != 0:
                        # out[p] needs z_t[p + s] -> rotate lanes by -s (np.roll semantics)
                        z_t = pltpu.roll(z_t, shift=(-s) % HW, axis=1)
                    rm, cm = row_masks[dy + 1], col_masks[dx + 1]
                    if rm is not None and cm is not None:
                        z_t = z_t * (rm * cm)
                    elif rm is not None:
                        z_t = z_t * rm
                    elif cm is not None:
                        z_t = z_t * cm
                    acc = z_t if acc is None else acc + z_t        # (cout, HW)

            # single contiguous full-block store: channel concat done in vregs
            o_ref[n] = jnp.concatenate([x_n, acc], axis=0)         # (cin+cout, HW)

    return kernel


def conv_block(x_nchw, w1, w2):
    """x_nchw: (N, Cin, H, W); w1: (80, Cin, 1, 1); w2: (16, 80, 3, 3).
    Returns (N, Cin+16, H, W) == torch.cat([x, body(x)], dim=1)."""
    N, Cin, H, W = x_nchw.shape
    Cmid = w1.shape[0]
    Cout = w2.shape[0]
    HW = H * W

    # Free contiguous reshapes only — no transpose / pad HBM passes.
    x_flat = x_nchw.reshape(N, Cin, HW).astype(jnp.float32)
    w1_k = w1.reshape(Cmid, Cin).astype(jnp.float32)
    # (Cout, Cmid, 3, 3) -> (3, 3, Cout, Cmid) -> (9*Cout, Cmid); row block t = ky*3 + kx
    w2_k = jnp.transpose(w2, (2, 3, 0, 1)).reshape(9 * Cout, Cmid).astype(jnp.float32)

    flops = 2 * N * HW * Cmid * (Cin + 9 * Cout)
    bytes_accessed = 4 * (x_flat.size + w1_k.size + w2_k.size + N * (Cin + Cout) * HW)

    out = pl.pallas_call(
        _make_kernel(N, H, W, Cin, Cmid, Cout),
        out_shape=jax.ShapeDtypeStruct((N, Cin + Cout, HW), jnp.float32),
        grid_spec=pltpu.PrefetchScalarGridSpec(
            num_scalar_prefetch=0,
            grid=(1,),  # single step: whole batch is one block, loop unrolled in-kernel
            in_specs=[
                pl.BlockSpec((N, Cin, HW), lambda i: (0, 0, 0)),
                pl.BlockSpec((Cmid, Cin), lambda i: (0, 0)),
                pl.BlockSpec((9 * Cout, Cmid), lambda i: (0, 0)),
            ],
            out_specs=pl.BlockSpec((N, Cin + Cout, HW), lambda i: (0, 0, 0)),
        ),
        compiler_params=pltpu.CompilerParams(
            dimension_semantics=("arbitrary",)),
        cost_estimate=pl.CostEstimate(
            flops=flops, transcendentals=0, bytes_accessed=bytes_accessed),
    )(x_flat, w1_k, w2_k)

    return out.reshape(N, Cin + Cout, H, W)


def _reference(x, w1, w2):
    """Pure-JAX NCHW reference mirroring the PyTorch forward."""
    dn = ("NCHW", "OIHW", "NCHW")
    h = jnp.maximum(x, 0.0)
    h = lax.conv_general_dilated(
        h, w1, (1, 1), [(0, 0), (0, 0)],
        dimension_numbers=lax.conv_dimension_numbers(h.shape, w1.shape, dn))
    h = jnp.maximum(h, 0.0)
    h = lax.conv_general_dilated(
        h, w2, (1, 1), [(1, 1), (1, 1)],
        dimension_numbers=lax.conv_dimension_numbers(h.shape, w2.shape, dn))
    return jnp.concatenate([x, h], axis=1)


if __name__ == "__main__":
    N, Cin, H, W = 2, 4, 16, 16
    Cmid, Cout = 80, 16  # fixed by the module: Conv2d(in,80,1x1), Conv2d(80,16,3x3)

    key = jax.random.PRNGKey(0)
    kx, k1, k2 = jax.random.split(key, 3)
    x = jax.random.normal(kx, (N, Cin, H, W), dtype=jnp.float32)
    # nn.init.normal_(weight, mean=0, std=0.01), bias=False
    w1 = 0.01 * jax.random.normal(k1, (Cmid, Cin, 1, 1), dtype=jnp.float32)
    w2 = 0.01 * jax.random.normal(k2, (Cout, Cmid, 3, 3), dtype=jnp.float32)

    out = conv_block(x, w1, w2)
    jax.block_until_ready(out)

    ref = _reference(x, w1, w2)
    assert out.shape == ref.shape == (N, Cin + Cout, H, W)
    # tolerance covers MXU f32 pass-count differences between the Pallas matmul path and
    # XLA's conv path; genuine layout/shift bugs show up at the ~1e-3 level.
    assert jnp.allclose(out, ref, rtol=1e-4, atol=1e-4), "mismatch vs reference"

    print("KERNEL_OK")
</pallas_src>

<mosaic_0001>
module attributes {stable_mosaic.version = 11 : i64} {
  func.func @kernel(%arg0: i32, %arg1: memref<2x4x256xf32, #tpu.memory_space<vmem>>, %arg2: memref<80x4xf32, #tpu.memory_space<vmem>>, %arg3: memref<144x80xf32, #tpu.memory_space<vmem>>, %arg4: memref<2x20x256xf32, #tpu.memory_space<vmem>>) attributes {dimension_semantics = [#tpu.dimension_semantics<arbitrary>], iteration_bounds = array<i64: 1>, scalar_prefetch = 0 : i64, scratch_operands = 0 : i64, tpu.core_type = #tpu.core_type<tc>, window_params = [{pipeline_mode = #tpu.pipeline_mode<synchronous>, transform_indices = @transform_0, window_bounds = array<i64: 2, 4, 256>}, {pipeline_mode = #tpu.pipeline_mode<synchronous>, transform_indices = @transform_1, window_bounds = array<i64: 80, 4>}, {pipeline_mode = #tpu.pipeline_mode<synchronous>, transform_indices = @transform_2, window_bounds = array<i64: 144, 80>}, {pipeline_mode = #tpu.pipeline_mode<synchronous>, transform_indices = @transform_3, window_bounds = array<i64: 2, 20, 256>}]} {
    %0 = tpu.iota {dimensions = array<i32: 1>} : vector<1x256xi32>
    %c15_i32 = arith.constant 15 : i32
    %1 = vector.broadcast %c15_i32 : i32 to vector<1x256xi32>
    %2 = arith.andi %0, %1 : vector<1x256xi32>
    %c16_i32 = arith.constant 16 : i32
    %3 = vector.broadcast %c16_i32 : i32 to vector<1x256xi32>
    %4 = arith.cmpi sge, %0, %3 : vector<1x256xi32>
    %5 = arith.extui %4 : vector<1x256xi1> to vector<1x256xi32>
    %6 = arith.sitofp %5 : vector<1x256xi32> to vector<1x256xf32>
    %c240_i32 = arith.constant 240 : i32
    %7 = vector.broadcast %c240_i32 : i32 to vector<1x256xi32>
    %8 = arith.cmpi slt, %0, %7 : vector<1x256xi32>
    %9 = arith.extui %8 : vector<1x256xi1> to vector<1x256xi32>
    %10 = arith.sitofp %9 : vector<1x256xi32> to vector<1x256xf32>
    %c1_i32 = arith.constant 1 : i32
    %11 = vector.broadcast %c1_i32 : i32 to vector<1x256xi32>
    %12 = arith.cmpi sge, %2, %11 : vector<1x256xi32>
    %13 = arith.extui %12 : vector<1x256xi1> to vector<1x256xi32>
    %14 = arith.sitofp %13 : vector<1x256xi32> to vector<1x256xf32>
    %c14_i32 = arith.constant 14 : i32
    %15 = vector.broadcast %c14_i32 : i32 to vector<1x256xi32>
    %16 = arith.cmpi sle, %2, %15 : vector<1x256xi32>
    %17 = arith.extui %16 : vector<1x256xi1> to vector<1x256xi32>
    %18 = arith.sitofp %17 : vector<1x256xi32> to vector<1x256xf32>
    %c0 = arith.constant 0 : index
    %c0_0 = arith.constant 0 : index
    %19 = vector.load %arg2[%c0, %c0_0] : memref<80x4xf32, #tpu.memory_space<vmem>>, vector<80x4xf32>
    %c0_1 = arith.constant 0 : index
    %c0_2 = arith.constant 0 : index
    %c0_3 = arith.constant 0 : index
    %20 = vector.load %arg1[%c0_1, %c0_2, %c0_3] : memref<2x4x256xf32, #tpu.memory_space<vmem>>, vector<1x4x256xf32>
    %21 = vector.shape_cast %20 : vector<1x4x256xf32> to vector<4x256xf32>
    %cst = arith.constant 0.000000e+00 : f32
    %22 = vector.broadcast %cst : f32 to vector<4x256xf32>
    %23 = arith.maximumf %21, %22 : vector<4x256xf32>
    %cst_4 = arith.constant dense<0.000000e+00> : vector<80x256xf32>
    %24 = tpu.matmul %19, %23, %cst_4 {dimension_numbers = #tpu.dot_dimension_numbers<[1], [0], [0], [1], [0, 0, 1, 1], [], []>} : vector<80x4xf32>, vector<4x256xf32>, vector<80x256xf32> -> vector<80x256xf32>
    %cst_5 = arith.constant 0.000000e+00 : f32
    %25 = vector.broadcast %cst_5 : f32 to vector<80x256xf32>
    %26 = arith.maximumf %24, %25 : vector<80x256xf32>
    %c0_6 = arith.constant 0 : index
    %c0_7 = arith.constant 0 : index
    %27 = vector.load %arg3[%c0_6, %c0_7] : memref<144x80xf32, #tpu.memory_space<vmem>>, vector<48x80xf32>
    %cst_8 = arith.constant dense<0.000000e+00> : vector<48x256xf32>
    %28 = tpu.matmul %27, %26, %cst_8 {dimension_numbers = #tpu.dot_dimension_numbers<[1], [0], [0], [1], [0, 0, 1, 1], [], []>} : vector<48x80xf32>, vector<80x256xf32>, vector<48x256xf32> -> vector<48x256xf32>
    %29 = vector.extract_strided_slice %28 {offsets = [0, 0], sizes = [16, 256], strides = [1, 1]} : vector<48x256xf32> to vector<16x256xf32>
    %c17_i32 = arith.constant 17 : i32
    %30 = tpu.dynamic_rotate %29 by %c17_i32 dim 1 : vector<16x256xf32>, i32 -> vector<16x256xf32>
    %31 = arith.mulf %6, %14 : vector<1x256xf32>
    %32 = vector.broadcast %31 : vector<1x256xf32> to vector<16x256xf32>
    %33 = arith.mulf %30, %32 : vector<16x256xf32>
    %34 = vector.extract_strided_slice %28 {offsets = [16, 0], sizes = [16, 256], strides = [1, 1]} : vector<48x256xf32> to vector<16x256xf32>
    %c16_i32_9 = arith.constant 16 : i32
    %35 = tpu.dynamic_rotate %34 by %c16_i32_9 dim 1 : vector<16x256xf32>, i32 -> vector<16x256xf32>
    %36 = vector.broadcast %6 : vector<1x256xf32> to vector<16x256xf32>
    %37 = arith.mulf %35, %36 : vector<16x256xf32>
    %38 = arith.addf %33, %37 : vector<16x256xf32>
    %39 = vector.extract_strided_slice %28 {offsets = [32, 0], sizes = [16, 256], strides = [1, 1]} : vector<48x256xf32> to vector<16x256xf32>
    %c15_i32_10 = arith.constant 15 : i32
    %40 = tpu.dynamic_rotate %39 by %c15_i32_10 dim 1 : vector<16x256xf32>, i32 -> vector<16x256xf32>
    %41 = arith.mulf %6, %18 : vector<1x256xf32>
    %42 = vector.broadcast %41 : vector<1x256xf32> to vector<16x256xf32>
    %43 = arith.mulf %40, %42 : vector<16x256xf32>
    %44 = arith.addf %38, %43 : vector<16x256xf32>
    %c48 = arith.constant 48 : index
    %c0_11 = arith.constant 0 : index
    %45 = vector.load %arg3[%c48, %c0_11] : memref<144x80xf32, #tpu.memory_space<vmem>>, vector<48x80xf32>
    %cst_12 = arith.constant dense<0.000000e+00> : vector<48x256xf32>
    %46 = tpu.matmul %45, %26, %cst_12 {dimension_numbers = #tpu.dot_dimension_numbers<[1], [0], [0], [1], [0, 0, 1, 1], [], []>} : vector<48x80xf32>, vector<80x256xf32>, vector<48x256xf32> -> vector<48x256xf32>
    %47 = vector.extract_strided_slice %46 {offsets = [0, 0], sizes = [16, 256], strides = [1, 1]} : vector<48x256xf32> to vector<16x256xf32>
    %c1_i32_13 = arith.constant 1 : i32
    %48 = tpu.dynamic_rotate %47 by %c1_i32_13 dim 1 : vector<16x256xf32>, i32 -> vector<16x256xf32>
    %49 = vector.broadcast %14 : vector<1x256xf32> to vector<16x256xf32>
    %50 = arith.mulf %48, %49 : vector<16x256xf32>
    %51 = arith.addf %44, %50 : vector<16x256xf32>
    %52 = vector.extract_strided_slice %46 {offsets = [16, 0], sizes = [16, 256], strides = [1, 1]} : vector<48x256xf32> to vector<16x256xf32>
    %53 = arith.addf %51, %52 : vector<16x256xf32>
    %54 = vector.extract_strided_slice %46 {offsets = [32, 0], sizes = [16, 256], strides = [1, 1]} : vector<48x256xf32> to vector<16x256xf32>
    %c255_i32 = arith.constant 255 : i32
    %55 = tpu.dynamic_rotate %54 by %c255_i32 dim 1 : vector<16x256xf32>, i32 -> vector<16x256xf32>
    %56 = vector.broadcast %18 : vector<1x256xf32> to vector<16x256xf32>
    %57 = arith.mulf %55, %56 : vector<16x256xf32>
    %58 = arith.addf %53, %57 : vector<16x256xf32>
    %c96 = arith.constant 96 : index
    %c0_14 = arith.constant 0 : index
    %59 = vector.load %arg3[%c96, %c0_14] : memref<144x80xf32, #tpu.memory_space<vmem>>, vector<48x80xf32>
    %cst_15 = arith.constant dense<0.000000e+00> : vector<48x256xf32>
    %60 = tpu.matmul %59, %26, %cst_15 {dimension_numbers = #tpu.dot_dimension_numbers<[1], [0], [0], [1], [0, 0, 1, 1], [], []>} : vector<48x80xf32>, vector<80x256xf32>, vector<48x256xf32> -> vector<48x256xf32>
    %61 = vector.extract_strided_slice %60 {offsets = [0, 0], sizes = [16, 256], strides = [1, 1]} : vector<48x256xf32> to vector<16x256xf32>
    %c241_i32 = arith.constant 241 : i32
    %62 = tpu.dynamic_rotate %61 by %c241_i32 dim 1 : vector<16x256xf32>, i32 -> vector<16x256xf32>
    %63 = arith.mulf %10, %14 : vector<1x256xf32>
    %64 = vector.broadcast %63 : vector<1x256xf32> to vector<16x256xf32>
    %65 = arith.mulf %62, %64 : vector<16x256xf32>
    %66 = arith.addf %58, %65 : vector<16x256xf32>
    %67 = vector.extract_strided_slice %60 {offsets = [16, 0], sizes = [16, 256], strides = [1, 1]} : vector<48x256xf32> to vector<16x256xf32>
    %c240_i32_16 = arith.constant 240 : i32
    %68 = tpu.dynamic_rotate %67 by %c240_i32_16 dim 1 : vector<16x256xf32>, i32 -> vector<16x256xf32>
    %69 = vector.broadcast %10 : vector<1x256xf32> to vector<16x256xf32>
    %70 = arith.mulf %68, %69 : vector<16x256xf32>
    %71 = arith.addf %66, %70 : vector<16x256xf32>
    %72 = vector.extract_strided_slice %60 {offsets = [32, 0], sizes = [16, 256], strides = [1, 1]} : vector<48x256xf32> to vector<16x256xf32>
    %c239_i32 = arith.constant 239 : i32
    %73 = tpu.dynamic_rotate %72 by %c239_i32 dim 1 : vector<16x256xf32>, i32 -> vector<16x256xf32>
    %74 = arith.mulf %10, %18 : vector<1x256xf32>
    %75 = vector.broadcast %74 : vector<1x256xf32> to vector<16x256xf32>
    %76 = arith.mulf %73, %75 : vector<16x256xf32>
    %77 = arith.addf %71, %76 : vector<16x256xf32>
    %78 = tpu.concatenate %21, %77 in 0 : vector<4x256xf32>, vector<16x256xf32> -> vector<20x256xf32>
    %c0_17 = arith.constant 0 : index
    %c0_18 = arith.constant 0 : index
    %c0_19 = arith.constant 0 : index
    %79 = vector.load %arg4[%c0_17, %c0_18, %c0_19] : memref<2x20x256xf32, #tpu.memory_space<vmem>>, vector<1x20x256xf32>
    %80 = vector.shape_cast %79 : vector<1x20x256xf32> to vector<20x256xf32>
    %81 = vector.shape_cast %78 : vector<20x256xf32> to vector<1x20x256xf32>
    tpu.vector_store %arg4[%c0_17, %c0_18, %c0_19], %81 {strides = array<i32>} : memref<2x20x256xf32, #tpu.memory_space<vmem>>, vector<1x20x256xf32>,
    %c1 = arith.constant 1 : index
    %c0_20 = arith.constant 0 : index
    %c0_21 = arith.constant 0 : index
    %82 = vector.load %arg1[%c1, %c0_20, %c0_21] : memref<2x4x256xf32, #tpu.memory_space<vmem>>, vector<1x4x256xf32>
    %83 = vector.shape_cast %82 : vector<1x4x256xf32> to vector<4x256xf32>
    %cst_22 = arith.constant 0.000000e+00 : f32
    %84 = vector.broadcast %cst_22 : f32 to vector<4x256xf32>
    %85 = arith.maximumf %83, %84 : vector<4x256xf32>
    %cst_23 = arith.constant dense<0.000000e+00> : vector<80x256xf32>
    %86 = tpu.matmul %19, %85, %cst_23 {dimension_numbers = #tpu.dot_dimension_numbers<[1], [0], [0], [1], [0, 0, 1, 1], [], []>} : vector<80x4xf32>, vector<4x256xf32>, vector<80x256xf32> -> vector<80x256xf32>
    %cst_24 = arith.constant 0.000000e+00 : f32
    %87 = vector.broadcast %cst_24 : f32 to vector<80x256xf32>
    %88 = arith.maximumf %86, %87 : vector<80x256xf32>
    %c0_25 = arith.constant 0 : index
    %c0_26 = arith.constant 0 : index
    %89 = vector.load %arg3[%c0_25, %c0_26] : memref<144x80xf32, #tpu.memory_space<vmem>>, vector<48x80xf32>
    %cst_27 = arith.constant dense<0.000000e+00> : vector<48x256xf32>
    %90 = tpu.matmul %89, %88, %cst_27 {dimension_numbers = #tpu.dot_dimension_numbers<[1], [0], [0], [1], [0, 0, 1, 1], [], []>} : vector<48x80xf32>, vector<80x256xf32>, vector<48x256xf32> -> vector<48x256xf32>
    %91 = vector.extract_strided_slice %90 {offsets = [0, 0], sizes = [16, 256], strides = [1, 1]} : vector<48x256xf32> to vector<16x256xf32>
    %c17_i32_28 = arith.constant 17 : i32
    %92 = tpu.dynamic_rotate %91 by %c17_i32_28 dim 1 : vector<16x256xf32>, i32 -> vector<16x256xf32>
    %93 = arith.mulf %6, %14 : vector<1x256xf32>
    %94 = vector.broadcast %93 : vector<1x256xf32> to vector<16x256xf32>
    %95 = arith.mulf %92, %94 : vector<16x256xf32>
    %96 = vector.extract_strided_slice %90 {offsets = [16, 0], sizes = [16, 256], strides = [1, 1]} : vector<48x256xf32> to vector<16x256xf32>
    %c16_i32_29 = arith.constant 16 : i32
    %97 = tpu.dynamic_rotate %96 by %c16_i32_29 dim 1 : vector<16x256xf32>, i32 -> vector<16x256xf32>
    %98 = vector.broadcast %6 : vector<1x256xf32> to vector<16x256xf32>
    %99 = arith.mulf %97, %98 : vector<16x256xf32>
    %100 = arith.addf %95, %99 : vector<16x256xf32>
    %101 = vector.extract_strided_slice %90 {offsets = [32, 0], sizes = [16, 256], strides = [1, 1]} : vector<48x256xf32> to vector<16x256xf32>
    %c15_i32_30 = arith.constant 15 : i32
    %102 = tpu.dynamic_rotate %101 by %c15_i32_30 dim 1 : vector<16x256xf32>, i32 -> vector<16x256xf32>
    %103 = arith.mulf %6, %18 : vector<1x256xf32>
    %104 = vector.broadcast %103 : vector<1x256xf32> to vector<16x256xf32>
    %105 = arith.mulf %102, %104 : vector<16x256xf32>
    %106 = arith.addf %100, %105 : vector<16x256xf32>
    %c48_31 = arith.constant 48 : index
    %c0_32 = arith.constant 0 : index
    %107 = vector.load %arg3[%c48_31, %c0_32] : memref<144x80xf32, #tpu.memory_space<vmem>>, vector<48x80xf32>
    %cst_33 = arith.constant dense<0.000000e+00> : vector<48x256xf32>
    %108 = tpu.matmul %107, %88, %cst_33 {dimension_numbers = #tpu.dot_dimension_numbers<[1], [0], [0], [1], [0, 0, 1, 1], [], []>} : vector<48x80xf32>, vector<80x256xf32>, vector<48x256xf32> -> vector<48x256xf32>
    %109 = vector.extract_strided_slice %108 {offsets = [0, 0], sizes = [16, 256], strides = [1, 1]} : vector<48x256xf32> to vector<16x256xf32>
    %c1_i32_34 = arith.constant 1 : i32
    %110 = tpu.dynamic_rotate %109 by %c1_i32_34 dim 1 : vector<16x256xf32>, i32 -> vector<16x256xf32>
    %111 = vector.broadcast %14 : vector<1x256xf32> to vector<16x256xf32>
    %112 = arith.mulf %110, %111 : vector<16x256xf32>
    %113 = arith.addf %106, %112 : vector<16x256xf32>
    %114 = vector.extract_strided_slice %108 {offsets = [16, 0], sizes = [16, 256], strides = [1, 1]} : vector<48x256xf32> to vector<16x256xf32>
    %115 = arith.addf %113, %114 : vector<16x256xf32>
    %116 = vector.extract_strided_slice %108 {offsets = [32, 0], sizes = [16, 256], strides = [1, 1]} : vector<48x256xf32> to vector<16x256xf32>
    %c255_i32_35 = arith.constant 255 : i32
    %117 = tpu.dynamic_rotate %116 by %c255_i32_35 dim 1 : vector<16x256xf32>, i32 -> vector<16x256xf32>
    %118 = vector.broadcast %18 : vector<1x256xf32> to vector<16x256xf32>
    %119 = arith.mulf %117, %118 : vector<16x256xf32>
    %120 = arith.addf %115, %119 : vector<16x256xf32>
    %c96_36 = arith.constant 96 : index
    %c0_37 = arith.constant 0 : index
    %121 = vector.load %arg3[%c96_36, %c0_37] : memref<144x80xf32, #tpu.memory_space<vmem>>, vector<48x80xf32>
    %cst_38 = arith.constant dense<0.000000e+00> : vector<48x256xf32>
    %122 = tpu.matmul %121, %88, %cst_38 {dimension_numbers = #tpu.dot_dimension_numbers<[1], [0], [0], [1], [0, 0, 1, 1], [], []>} : vector<48x80xf32>, vector<80x256xf32>, vector<48x256xf32> -> vector<48x256xf32>
    %123 = vector.extract_strided_slice %122 {offsets = [0, 0], sizes = [16, 256], strides = [1, 1]} : vector<48x256xf32> to vector<16x256xf32>
    %c241_i32_39 = arith.constant 241 : i32
    %124 = tpu.dynamic_rotate %123 by %c241_i32_39 dim 1 : vector<16x256xf32>, i32 -> vector<16x256xf32>
    %125 = arith.mulf %10, %14 : vector<1x256xf32>
    %126 = vector.broadcast %125 : vector<1x256xf32> to vector<16x256xf32>
    %127 = arith.mulf %124, %126 : vector<16x256xf32>
    %128 = arith.addf %120, %127 : vector<16x256xf32>
    %129 = vector.extract_strided_slice %122 {offsets = [16, 0], sizes = [16, 256], strides = [1, 1]} : vector<48x256xf32> to vector<16x256xf32>
    %c240_i32_40 = arith.constant 240 : i32
    %130 = tpu.dynamic_rotate %129 by %c240_i32_40 dim 1 : vector<16x256xf32>, i32 -> vector<16x256xf32>
    %131 = vector.broadcast %10 : vector<1x256xf32> to vector<16x256xf32>
    %132 = arith.mulf %130, %131 : vector<16x256xf32>
    %133 = arith.addf %128, %132 : vector<16x256xf32>
    %134 = vector.extract_strided_slice %122 {offsets = [32, 0], sizes = [16, 256], strides = [1, 1]} : vector<48x256xf32> to vector<16x256xf32>
    %c239_i32_41 = arith.constant 239 : i32
    %135 = tpu.dynamic_rotate %134 by %c239_i32_41 dim 1 : vector<16x256xf32>, i32 -> vector<16x256xf32>
    %136 = arith.mulf %10, %18 : vector<1x256xf32>
    %137 = vector.broadcast %136 : vector<1x256xf32> to vector<16x256xf32>
    %138 = arith.mulf %135, %137 : vector<16x256xf32>
    %139 = arith.addf %133, %138 : vector<16x256xf32>
    %140 = tpu.concatenate %83, %139 in 0 : vector<4x256xf32>, vector<16x256xf32> -> vector<20x256xf32>
    %c1_42 = arith.constant 1 : index
    %c0_43 = arith.constant 0 : index
    %c0_44 = arith.constant 0 : index
    %141 = vector.load %arg4[%c1_42, %c0_43, %c0_44] : memref<2x20x256xf32, #tpu.memory_space<vmem>>, vector<1x20x256xf32>
    %142 = vector.shape_cast %141 : vector<1x20x256xf32> to vector<20x256xf32>
    %143 = vector.shape_cast %140 : vector<20x256xf32> to vector<1x20x256xf32>
    tpu.vector_store %arg4[%c1_42, %c0_43, %c0_44], %143 {strides = array<i32>} : memref<2x20x256xf32, #tpu.memory_space<vmem>>, vector<1x20x256xf32>,
    return
  }
  func.func @transform_0(%arg0: i32) -> (i32, i32, i32) {
    %c0_i32 = arith.constant 0 : i32
    %c0_i32_0 = arith.constant 0 : i32
    %c0_i32_1 = arith.constant 0 : i32
    %c0_i32_2 = arith.constant 0 : i32
    return %c0_i32, %c0_i32_0, %c0_i32_1 : i32, i32, i32
  }
  func.func @transform_1(%arg0: i32) -> (i32, i32) {
    %c0_i32 = arith.constant 0 : i32
    %c0_i32_0 = arith.constant 0 : i32
    %c0_i32_1 = arith.constant 0 : i32
    return %c0_i32, %c0_i32_0 : i32, i32
  }
  func.func @transform_2(%arg0: i32) -> (i32, i32) {
    %c0_i32 = arith.constant 0 : i32
    %c0_i32_0 = arith.constant 0 : i32
    %c0_i32_1 = arith.constant 0 : i32
    return %c0_i32, %c0_i32_0 : i32, i32
  }
  func.func @transform_3(%arg0: i32) -> (i32, i32, i32) {
    %c0_i32 = arith.constant 0 : i32
    %c0_i32_0 = arith.constant 0 : i32
    %c0_i32_1 = arith.constant 0 : i32
    %c0_i32_2 = arith.constant 0 : i32
    return %c0_i32, %c0_i32_0, %c0_i32_1 : i32, i32, i32
  }
}

</mosaic_0001>

<llo_original>
// kernel: tpu_custom_call.1
$region0: #{tpu_custom_call.1}
  #allocation0 [shape = 'u32[]', space=smem, size = 0x4, offset = 0x4, fixed_abs, tag = 'smem constant byte address 0x4 - core index']
  #allocation1 [shape = 'u32[72,128]{1,0:T(1,128)}', space=vmem, size = 0x9000, scoped, tag = 'internal scratch']
  %s0 = inlined_call_operand.vmem [shape: f32[2,4,256], index: 0, kind: input, shape index: {}]
  %s1 = inlined_call_operand.vmem [shape: f32[80,4], index: 1, kind: input, shape index: {}]
  %s2 = inlined_call_operand.hbm [shape: f32[144,80], index: 2, kind: input, shape index: {}]
  %s3 = inlined_call_operand.vmem [shape: f32[2,20,256], index: 3, kind: output, shape index: {}]
  %s4 = sld [smem:[#allocation0]]
  $region26: #{tpu_custom_call.1} parent=0
    _
  %s6 = ssub.s32 1, %s4
  %s7 = scalar_select 0, %s6, %s4
  $region1: #{tpu_custom_call.1} parent=0
    #allocation2 [shape = 'u8[73728]{0}', space=vmem, size = 0x12000, scoped, tag = 'input window, operand 2, single buffered']
    #allocation3 [shape = 's32[1]{0}', space=sflag, size = 0x4, scoped, tag = 'scoped memory for tpu_custom_call.1']
    %8 = vsyncpa [#allocation3], 0
    // Predicated region
    $region2: #{tpu_custom_call.1} parent=1 // pred_check
      _
    $region3: #{tpu_custom_call.1} parent=1 // pred_check_branch
      %10 = sbr.rel (0) target = $region5
    $region4: #{tpu_custom_call.1} parent=1 // pred_region
      _
    $region5: #{tpu_custom_call.1} parent=1 // pred_fallthru
      _
    // Predicated region
    $region6: #{tpu_custom_call.1} parent=1 // pred_check
      _
    $region7: #{tpu_custom_call.1} parent=1 // pred_check_branch
      %12 = sbr.rel (0) target = $region9
    $region8: #{tpu_custom_call.1} parent=1 // pred_region
      _
    $region9: #{tpu_custom_call.1} parent=1 // pred_fallthru
      _
    // Predicated region
    $region10: #{tpu_custom_call.1} parent=1 // pred_check
      _
    $region11: #{tpu_custom_call.1} parent=1 // pred_check_branch
      %14 = sbr.rel (0) target = $region13
    $region12: #{tpu_custom_call.1} parent=1 // pred_region
      %16 = vsyncadd [#allocation3], 0
      %s17 = sshll.u32 %s2, 4
      %s18 = int_to_ptr.hbm [resolvable:$true] %s17
      %s19 = sshll.u32 [#allocation2], 4
      %s20 = int_to_ptr.vmem [resolvable:$true] %s19
      %25 = dma.hbm_to_vmem [thread:$0]  %s18, 2304, %s20, [#allocation3], 128, 128, 8
    $region13: #{tpu_custom_call.1} parent=1 // pred_fallthru
      _
    // Predicated region
    $region14: #{tpu_custom_call.1} parent=1 // pred_check
      _
    $region15: #{tpu_custom_call.1} parent=1 // pred_check_branch
      %27 = sbr.rel (0) target = $region17
    $region16: #{tpu_custom_call.1} parent=1 // pred_region
      %29 = dma.done [#allocation3], 2304
    $region17: #{tpu_custom_call.1} parent=1 // pred_fallthru
      _
    %v30 = vlaneseq
    %v31 = vand.u32 %v30, 127
    %v32 = vadd.s32 %v31, 128
    %v33 = vand.u32 %v31, 15
    %v34 = vand.u32 %v32, 15
    %vm35 = vcmp.ge.s32.totalorder %v31, 16
    %vm36 = vcmp.ge.s32.totalorder %v32, 16
    %v37 = vsel %vm35, 1, 0
    %v38 = vsel %vm36, 1, 0
    %v39 = vcvt.s32.f32 %v37
    %v40 = vcvt.s32.f32 %v38
    %vm41 = vcmp.lt.s32.totalorder %v31, 240
    %vm42 = vcmp.lt.s32.totalorder %v32, 240
    %v43 = vsel %vm41, 1, 0
    %v44 = vsel %vm42, 1, 0
    %v45 = vcvt.s32.f32 %v43
    %v46 = vcvt.s32.f32 %v44
    %vm47 = vcmp.ge.s32.totalorder %v33, 1
    %vm48 = vcmp.ge.s32.totalorder %v34, 1
    %v49 = vsel %vm47, 1, 0
    %v50 = vsel %vm48, 1, 0
    %v51 = vcvt.s32.f32 %v49
    %v52 = vcvt.s32.f32 %v50
    %vm53 = vcmp.le.s32.totalorder %v33, 14
    %vm54 = vcmp.le.s32.totalorder %v34, 14
    %v55 = vsel %vm53, 1, 0
    %v56 = vsel %vm54, 1, 0
    %v57 = vcvt.s32.f32 %v55
    %v58 = vcvt.s32.f32 %v56
    %v59 = vld [vmem:[%s1] sm:$0xff]
    %v60 = vld [vmem:[%s1 + $0x8] sm:$0xff]
    %v61 = vld [vmem:[%s1 + $0x10] sm:$0xff]
    %v62 = vld [vmem:[%s1 + $0x18] sm:$0xff]
    %v63 = vld [vmem:[%s1 + $0x20] sm:$0xff]
    %v64 = vld [vmem:[%s1 + $0x28] sm:$0xff]
    %v65 = vld [vmem:[%s1 + $0x30] sm:$0xff]
    %v66 = vld [vmem:[%s1 + $0x38] sm:$0xff]
    %v67 = vld [vmem:[%s1 + $0x40] sm:$0xff]
    %v68 = vld [vmem:[%s1 + $0x48] sm:$0xff]
    %v69 = vld [vmem:[%s0] sm:$0xff]
    %v70 = vmax.f32 %v69, 0.0
    %72 = vst [vmem:[#allocation1] ss:$2 sm:$0xff] %v70
    %v73 = vld.sshfl [vmem:[#allocation1] sm:$0xff pattern:$0x75316420]
    %v74 = vld.sshfl [vmem:[#allocation1 + $0x8] sm:$0xff pattern:$0x75316420]
    %vm75 = vcmask 31744
    %v77 = vsel %vm75, %v59, 0
    %v80 = vsel %vm75, %v60, 0
    %v83 = vsel %vm75, %v61, 0
    %v86 = vsel %vm75, %v62, 0
    %v89 = vsel %vm75, %v63, 0
    %v92 = vsel %vm75, %v64, 0
    %v95 = vsel %vm75, %v65, 0
    %v98 = vsel %vm75, %v66, 0
    %v101 = vsel %vm75, %v67, 0
    %v104 = vsel %vm75, %v68, 0
    %vm106 = vcmask 1043456
    %v107 = vsel %vm106, %v73, 0
    %v109 = vsel %vm106, %v74, 0
    %111 = vmatpush.msra.mxu0 0.0
    %112 = vmatpush.msra.mxu0 0.0
    %113 = vmatpush.msra.mxu0 0.0
    %114 = vmatpush.msra.mxu0 0.0
    %115 = vmatpush.msra.mxu0 0.0
    %116 = vmatpush.msra.mxu0 0.0
    %117 = vmatpush.msra.mxu0 0.0
    %118 = vmatpush.msra.mxu0 0.0
    %119 = vmatpush.msra.mxu0 0.0
    %120 = vmatpush.msra.mxu0 0.0
    %121 = vmatpush.msra.mxu0 0.0
    %122 = vmatpush.msra.mxu0 0.0
    %123 = vmatpush.msra.mxu0 0.0
    %124 = vmatpush.msra.mxu0 0.0
    %125 = vmatpush.msra.mxu0 0.0
    %126 = vmatpush.msra.mxu0 %v107
    %127 = vmatmul.f32.gmra.mxu0 %v77
    %v128 = vpop.f32.mrf.mxu0
    %v129 = vadd.f32 0.0, %v128
    %130 = vmatmul.f32.gmra.mxu0 %v80
    %v131 = vpop.f32.mrf.mxu0
    %v132 = vadd.f32 0.0, %v131
    %133 = vmatmul.f32.gmra.mxu0 %v83
    %v134 = vpop.f32.mrf.mxu0
    %v135 = vadd.f32 0.0, %v134
    %136 = vmatmul.f32.gmra.mxu0 %v86
    %v137 = vpop.f32.mrf.mxu0
    %v138 = vadd.f32 0.0, %v137
    %139 = vmatmul.f32.gmra.mxu0 %v89
    %v140 = vpop.f32.mrf.mxu0
    %v141 = vadd.f32 0.0, %v140
    %142 = vmatmul.f32.gmra.mxu0 %v92
    %v143 = vpop.f32.mrf.mxu0
    %v144 = vadd.f32 0.0, %v143
    %145 = vmatmul.f32.gmra.mxu0 %v95
    %v146 = vpop.f32.mrf.mxu0
    %v147 = vadd.f32 0.0, %v146
    %148 = vmatmul.f32.gmra.mxu0 %v98
    %v149 = vpop.f32.mrf.mxu0
    %v150 = vadd.f32 0.0, %v149
    %151 = vmatmul.f32.gmra.mxu0 %v101
    %v152 = vpop.f32.mrf.mxu0
    %v153 = vadd.f32 0.0, %v152
    %154 = vmatmul.f32.gmra.mxu0 %v104
    %v155 = vpop.f32.mrf.mxu0
    %v156 = vadd.f32 0.0, %v155
    %157 = vdwg.mxu0
    %158 = vmatpush.msra.mxu0 0.0
    %159 = vmatpush.msra.mxu0 0.0
    %160 = vmatpush.msra.mxu0 0.0
    %161 = vmatpush.msra.mxu0 0.0
    %162 = vmatpush.msra.mxu0 0.0
    %163 = vmatpush.msra.mxu0 0.0
    %164 = vmatpush.msra.mxu0 0.0
    %165 = vmatpush.msra.mxu0 0.0
    %166 = vmatpush.msra.mxu0 0.0
    %167 = vmatpush.msra.mxu0 0.0
    %168 = vmatpush.msra.mxu0 0.0
    %169 = vmatpush.msra.mxu0 0.0
    %170 = vmatpush.msra.mxu0 0.0
    %171 = vmatpush.msra.mxu0 0.0
    %172 = vmatpush.msra.mxu0 0.0
    %173 = vmatpush.msra.mxu0 %v109
    %174 = vmatmul.f32.gmra.mxu0 %v77
    %v175 = vpop.f32.mrf.mxu0
    %v176 = vadd.f32 0.0, %v175
    %177 = vmatmul.f32.gmra.mxu0 %v80
    %v178 = vpop.f32.mrf.mxu0
    %v179 = vadd.f32 0.0, %v178
    %180 = vmatmul.f32.gmra.mxu0 %v83
    %v181 = vpop.f32.mrf.mxu0
    %v182 = vadd.f32 0.0, %v181
    %183 = vmatmul.f32.gmra.mxu0 %v86
    %v184 = vpop.f32.mrf.mxu0
    %v185 = vadd.f32 0.0, %v184
    %186 = vmatmul.f32.gmra.mxu0 %v89
    %v187 = vpop.f32.mrf.mxu0
    %v188 = vadd.f32 0.0, %v187
    %189 = vmatmul.f32.gmra.mxu0 %v92
    %v190 = vpop.f32.mrf.mxu0
    %v191 = vadd.f32 0.0, %v190
    %192 = vmatmul.f32.gmra.mxu0 %v95
    %v193 = vpop.f32.mrf.mxu0
    %v194 = vadd.f32 0.0, %v193
    %195 = vmatmul.f32.gmra.mxu0 %v98
    %v196 = vpop.f32.mrf.mxu0
    %v197 = vadd.f32 0.0, %v196
    %198 = vmatmul.f32.gmra.mxu0 %v101
    %v199 = vpop.f32.mrf.mxu0
    %v200 = vadd.f32 0.0, %v199
    %201 = vmatmul.f32.gmra.mxu0 %v104
    %v202 = vpop.f32.mrf.mxu0
    %v203 = vadd.f32 0.0, %v202
    %204 = vdwg.mxu0
    %v205 = vmax.f32 %v129, 0.0
    %v206 = vmax.f32 %v176, 0.0
    %v207 = vmax.f32 %v132, 0.0
    %v208 = vmax.f32 %v179, 0.0
    %v209 = vmax.f32 %v135, 0.0
    %v210 = vmax.f32 %v182, 0.0
    %v211 = vmax.f32 %v138, 0.0
    %v212 = vmax.f32 %v185, 0.0
    %v213 = vmax.f32 %v141, 0.0
    %v214 = vmax.f32 %v188, 0.0
    %v215 = vmax.f32 %v144, 0.0
    %v216 = vmax.f32 %v191, 0.0
    %v217 = vmax.f32 %v147, 0.0
    %v218 = vmax.f32 %v194, 0.0
    %v219 = vmax.f32 %v150, 0.0
    %v220 = vmax.f32 %v197, 0.0
    %v221 = vmax.f32 %v153, 0.0
    %v222 = vmax.f32 %v200, 0.0
    %v223 = vmax.f32 %v156, 0.0
    %v224 = vmax.f32 %v203, 0.0
    %v225 = vld [vmem:[#allocation2] sm:$0xff]
    %v226 = vld [vmem:[#allocation2 + $0x8] sm:$0xff]
    %v227 = vld [vmem:[#allocation2 + $0x10] sm:$0xff]
    %v228 = vld [vmem:[#allocation2 + $0x18] sm:$0xff]
    %v229 = vld [vmem:[#allocation2 + $0x20] sm:$0xff]
    %v230 = vld [vmem:[#allocation2 + $0x28] sm:$0xff]
    %vm231 = vcmask 654336
    %v233 = vsel %vm231, %v225, 0
    %v236 = vsel %vm231, %v226, 0
    %v239 = vsel %vm231, %v227, 0
    %v242 = vsel %vm231, %v228, 0
    %v245 = vsel %vm231, %v229, 0
    %v248 = vsel %vm231, %v230, 0
    %250 = vmatpush.msra.mxu0 0.0
    %251 = vmatpush.msra.mxu0 0.0
    %252 = vmatpush.msra.mxu0 0.0
    %253 = vmatpush.msra.mxu0 0.0
    %254 = vmatpush.msra.mxu0 0.0
    %255 = vmatpush.msra.mxu0 0.0
    %256 = vmatpush.msra.mxu0 %v223
    %257 = vmatpush.msra.mxu0 %v221
    %258 = vmatpush.msra.mxu0 %v219
    %259 = vmatpush.msra.mxu0 %v217
    %260 = vmatpush.msra.mxu0 %v215
    %261 = vmatpush.msra.mxu0 %v213
    %262 = vmatpush.msra.mxu0 %v211
    %263 = vmatpush.msra.mxu0 %v209
    %264 = vmatpush.msra.mxu0 %v207
    %265 = vmatpush.msra.mxu0 %v205
    %266 = vmatmul.f32.gmra.mxu0 %v233
    %v267 = vpop.f32.mrf.mxu0
    %v268 = vadd.f32 0.0, %v267
    %269 = vmatmul.f32.gmra.mxu0 %v236
    %v270 = vpop.f32.mrf.mxu0
    %v271 = vadd.f32 0.0, %v270
    %272 = vmatmul.f32.gmra.mxu0 %v239
    %v273 = vpop.f32.mrf.mxu0
    %v274 = vadd.f32 0.0, %v273
    %275 = vmatmul.f32.gmra.mxu0 %v242
    %v276 = vpop.f32.mrf.mxu0
    %v277 = vadd.f32 0.0, %v276
    %278 = vmatmul.f32.gmra.mxu0 %v245
    %v279 = vpop.f32.mrf.mxu0
    %v280 = vadd.f32 0.0, %v279
    %281 = vmatmul.f32.gmra.mxu0 %v248
    %v282 = vpop.f32.mrf.mxu0
    %v283 = vadd.f32 0.0, %v282
    %284 = vdwg.mxu0
    %285 = vmatpush.msra.mxu0 0.0
    %286 = vmatpush.msra.mxu0 0.0
    %287 = vmatpush.msra.mxu0 0.0
    %288 = vmatpush.msra.mxu0 0.0
    %289 = vmatpush.msra.mxu0 0.0
    %290 = vmatpush.msra.mxu0 0.0
    %291 = vmatpush.msra.mxu0 %v224
    %292 = vmatpush.msra.mxu0 %v222
    %293 = vmatpush.msra.mxu0 %v220
    %294 = vmatpush.msra.mxu0 %v218
    %295 = vmatpush.msra.mxu0 %v216
    %296 = vmatpush.msra.mxu0 %v214
    %297 = vmatpush.msra.mxu0 %v212
    %298 = vmatpush.msra.mxu0 %v210
    %299 = vmatpush.msra.mxu0 %v208
    %300 = vmatpush.msra.mxu0 %v206
    %301 = vmatmul.f32.gmra.mxu0 %v233
    %v302 = vpop.f32.mrf.mxu0
    %v303 = vadd.f32 0.0, %v302
    %304 = vmatmul.f32.gmra.mxu0 %v236
    %v305 = vpop.f32.mrf.mxu0
    %v306 = vadd.f32 0.0, %v305
    %307 = vmatmul.f32.gmra.mxu0 %v239
    %v308 = vpop.f32.mrf.mxu0
    %v309 = vadd.f32 0.0, %v308
    %310 = vmatmul.f32.gmra.mxu0 %v242
    %v311 = vpop.f32.mrf.mxu0
    %v312 = vadd.f32 0.0, %v311
    %313 = vmatmul.f32.gmra.mxu0 %v245
    %v314 = vpop.f32.mrf.mxu0
    %v315 = vadd.f32 0.0, %v314
    %316 = vmatmul.f32.gmra.mxu0 %v248
    %v317 = vpop.f32.mrf.mxu0
    %v318 = vadd.f32 0.0, %v317
    %319 = vdwg.mxu0
    %320 = vrot.lane.b32.xlu0 %v268, 17
    %v321 = vpop.permute.xlu0 %320
    %322 = vrot.lane.b32.xlu0 %v271, 17
    %v323 = vpop.permute.xlu0 %322
    %324 = vrot.lane.b32.xlu0 %v303, 17
    %v325 = vpop.permute.xlu0 %324
    %326 = vrot.lane.b32.xlu0 %v306, 17
    %v327 = vpop.permute.xlu0 %326
    %vm328 = vcmp.lt.s32.totalorder %v31, 17
    %v329 = vsel %vm328, %v321, %v325
    %v330 = vsel %vm328, %v323, %v327
    %v331 = vsel %vm328, %v325, %v321
    %v332 = vsel %vm328, %v327, %v323
    %v333 = vmul.f32 %v39, %v51
    %v334 = vmul.f32 %v40, %v52
    %v335 = vmul.f32 %v331, %v333
    %v336 = vmul.f32 %v329, %v334
    %v337 = vmul.f32 %v332, %v333
    %v338 = vmul.f32 %v330, %v334
    %339 = vrot.lane.b32.xlu0 %v274, 16
    %v340 = vpop.permute.xlu0 %339
    %341 = vrot.lane.b32.xlu0 %v277, 16
    %v342 = vpop.permute.xlu0 %341
    %343 = vrot.lane.b32.xlu0 %v309, 16
    %v344 = vpop.permute.xlu0 %343
    %345 = vrot.lane.b32.xlu0 %v312, 16
    %v346 = vpop.permute.xlu0 %345
    %vm347 = vcmp.lt.s32.totalorder %v31, 16
    %v348 = vsel %vm347, %v340, %v344
    %v349 = vsel %vm347, %v342, %v346
    %v350 = vsel %vm347, %v344, %v340
    %v351 = vsel %vm347, %v346, %v342
    %v352 = vmul.f32 %v350, %v39
    %v353 = vmul.f32 %v348, %v40
    %v354 = vmul.f32 %v351, %v39
    %v355 = vmul.f32 %v349, %v40
    %v356 = vadd.f32 %v335, %v352
    %v357 = vadd.f32 %v336, %v353
    %v358 = vadd.f32 %v337, %v354
    %v359 = vadd.f32 %v338, %v355
    %360 = vrot.lane.b32.xlu0 %v280, 15
    %v361 = vpop.permute.xlu0 %360
    %362 = vrot.lane.b32.xlu0 %v283, 15
    %v363 = vpop.permute.xlu0 %362
    %364 = vrot.lane.b32.xlu0 %v315, 15
    %v365 = vpop.permute.xlu0 %364
    %366 = vrot.lane.b32.xlu0 %v318, 15
    %v367 = vpop.permute.xlu0 %366
    %vm368 = vcmp.lt.s32.totalorder %v31, 15
    %v369 = vsel %vm368, %v361, %v365
    %v370 = vsel %vm368, %v363, %v367
    %v371 = vsel %vm368, %v365, %v361
    %v372 = vsel %vm368, %v367, %v363
    %v373 = vmul.f32 %v39, %v57
    %v374 = vmul.f32 %v40, %v58
    %v375 = vmul.f32 %v371, %v373
    %v376 = vmul.f32 %v369, %v374
    %v377 = vmul.f32 %v372, %v373
    %v378 = vmul.f32 %v370, %v374
    %v379 = vadd.f32 %v356, %v375
    %v380 = vadd.f32 %v357, %v376
    %v381 = vadd.f32 %v358, %v377
    %v382 = vadd.f32 %v359, %v378
    %v383 = vld [vmem:[#allocation2 + $0x30] sm:$0xff]
    %v384 = vld [vmem:[#allocation2 + $0x38] sm:$0xff]
    %v385 = vld [vmem:[#allocation2 + $0x40] sm:$0xff]
    %v386 = vld [vmem:[#allocation2 + $0x48] sm:$0xff]
    %v387 = vld [vmem:[#allocation2 + $0x50] sm:$0xff]
    %v388 = vld [vmem:[#allocation2 + $0x58] sm:$0xff]
    %v390 = vsel %vm231, %v383, 0
    %v393 = vsel %vm231, %v384, 0
    %v396 = vsel %vm231, %v385, 0
    %v399 = vsel %vm231, %v386, 0
    %v402 = vsel %vm231, %v387, 0
    %v405 = vsel %vm231, %v388, 0
    %407 = vmatpush.msra.mxu0 0.0
    %408 = vmatpush.msra.mxu0 0.0
    %409 = vmatpush.msra.mxu0 0.0
    %410 = vmatpush.msra.mxu0 0.0
    %411 = vmatpush.msra.mxu0 0.0
    %412 = vmatpush.msra.mxu0 0.0
    %413 = vmatpush.msra.mxu0 %v223
    %414 = vmatpush.msra.mxu0 %v221
    %415 = vmatpush.msra.mxu0 %v219
    %416 = vmatpush.msra.mxu0 %v217
    %417 = vmatpush.msra.mxu0 %v215
    %418 = vmatpush.msra.mxu0 %v213
    %419 = vmatpush.msra.mxu0 %v211
    %420 = vmatpush.msra.mxu0 %v209
    %421 = vmatpush.msra.mxu0 %v207
    %422 = vmatpush.msra.mxu0 %v205
    %423 = vmatmul.f32.gmra.mxu0 %v390
    %v424 = vpop.f32.mrf.mxu0
    %v425 = vadd.f32 0.0, %v424
    %426 = vmatmul.f32.gmra.mxu0 %v393
    %v427 = vpop.f32.mrf.mxu0
    %v428 = vadd.f32 0.0, %v427
    %429 = vmatmul.f32.gmra.mxu0 %v396
    %v430 = vpop.f32.mrf.mxu0
    %v431 = vadd.f32 0.0, %v430
    %432 = vmatmul.f32.gmra.mxu0 %v399
    %v433 = vpop.f32.mrf.mxu0
    %v434 = vadd.f32 0.0, %v433
    %435 = vmatmul.f32.gmra.mxu0 %v402
    %v436 = vpop.f32.mrf.mxu0
    %v437 = vadd.f32 0.0, %v436
    %438 = vmatmul.f32.gmra.mxu0 %v405
    %v439 = vpop.f32.mrf.mxu0
    %v440 = vadd.f32 0.0, %v439
    %441 = vdwg.mxu0
    %442 = vmatpush.msra.mxu0 0.0
    %443 = vmatpush.msra.mxu0 0.0
    %444 = vmatpush.msra.mxu0 0.0
    %445 = vmatpush.msra.mxu0 0.0
    %446 = vmatpush.msra.mxu0 0.0
    %447 = vmatpush.msra.mxu0 0.0
    %448 = vmatpush.msra.mxu0 %v224
    %449 = vmatpush.msra.mxu0 %v222
    %450 = vmatpush.msra.mxu0 %v220
    %451 = vmatpush.msra.mxu0 %v218
    %452 = vmatpush.msra.mxu0 %v216
    %453 = vmatpush.msra.mxu0 %v214
    %454 = vmatpush.msra.mxu0 %v212
    %455 = vmatpush.msra.mxu0 %v210
    %456 = vmatpush.msra.mxu0 %v208
    %457 = vmatpush.msra.mxu0 %v206
    %458 = vmatmul.f32.gmra.mxu0 %v390
    %v459 = vpop.f32.mrf.mxu0
    %v460 = vadd.f32 0.0, %v459
    %461 = vmatmul.f32.gmra.mxu0 %v393
    %v462 = vpop.f32.mrf.mxu0
    %v463 = vadd.f32 0.0, %v462
    %464 = vmatmul.f32.gmra.mxu0 %v396
    %v465 = vpop.f32.mrf.mxu0
    %v466 = vadd.f32 0.0, %v465
    %467 = vmatmul.f32.gmra.mxu0 %v399
    %v468 = vpop.f32.mrf.mxu0
    %v469 = vadd.f32 0.0, %v468
    %470 = vmatmul.f32.gmra.mxu0 %v402
    %v471 = vpop.f32.mrf.mxu0
    %v472 = vadd.f32 0.0, %v471
    %473 = vmatmul.f32.gmra.mxu0 %v405
    %v474 = vpop.f32.mrf.mxu0
    %v475 = vadd.f32 0.0, %v474
    %476 = vdwg.mxu0
    %477 = vrot.lane.b32.xlu0 %v425, 1
    %v478 = vpop.permute.xlu0 %477
    %479 = vrot.lane.b32.xlu0 %v428, 1
    %v480 = vpop.permute.xlu0 %479
    %481 = vrot.lane.b32.xlu0 %v460, 1
    %v482 = vpop.permute.xlu0 %481
    %483 = vrot.lane.b32.xlu0 %v463, 1
    %v484 = vpop.permute.xlu0 %483
    %vm485 = vcmp.lt.s32.totalorder %v31, 1
    %v486 = vsel %vm485, %v478, %v482
    %v487 = vsel %vm485, %v480, %v484
    %v488 = vsel %vm485, %v482, %v478
    %v489 = vsel %vm485, %v484, %v480
    %v490 = vmul.f32 %v488, %v51
    %v491 = vmul.f32 %v486, %v52
    %v492 = vmul.f32 %v489, %v51
    %v493 = vmul.f32 %v487, %v52
    %v494 = vadd.f32 %v379, %v490
    %v495 = vadd.f32 %v380, %v491
    %v496 = vadd.f32 %v381, %v492
    %v497 = vadd.f32 %v382, %v493
    %v498 = vadd.f32 %v494, %v431
    %v499 = vadd.f32 %v495, %v466
    %v500 = vadd.f32 %v496, %v434
    %v501 = vadd.f32 %v497, %v469
    %502 = vrot.lane.b32.xlu0 %v437, 127
    %v503 = vpop.permute.xlu0 %502
    %504 = vrot.lane.b32.xlu0 %v440, 127
    %v505 = vpop.permute.xlu0 %504
    %506 = vrot.lane.b32.xlu0 %v472, 127
    %v507 = vpop.permute.xlu0 %506
    %508 = vrot.lane.b32.xlu0 %v475, 127
    %v509 = vpop.permute.xlu0 %508
    %vm510 = vcmp.lt.s32.totalorder %v31, 127
    %v511 = vsel %vm510, %v503, %v507
    %v512 = vsel %vm510, %v505, %v509
    %v513 = vsel %vm510, %v507, %v503
    %v514 = vsel %vm510, %v509, %v505
    %v515 = vmul.f32 %v511, %v57
    %v516 = vmul.f32 %v513, %v58
    %v517 = vmul.f32 %v512, %v57
    %v518 = vmul.f32 %v514, %v58
    %v519 = vadd.f32 %v498, %v515
    %v520 = vadd.f32 %v499, %v516
    %v521 = vadd.f32 %v500, %v517
    %v522 = vadd.f32 %v501, %v518
    %v523 = vld [vmem:[#allocation2 + $0x60] sm:$0xff]
    %v524 = vld [vmem:[#allocation2 + $0x68] sm:$0xff]
    %v525 = vld [vmem:[#allocation2 + $0x70] sm:$0xff]
    %v526 = vld [vmem:[#allocation2 + $0x78] sm:$0xff]
    %v527 = vld [vmem:[#allocation2 + $0x80] sm:$0xff]
    %v528 = vld [vmem:[#allocation2 + $0x88] sm:$0xff]
    %v530 = vsel %vm231, %v523, 0
    %v533 = vsel %vm231, %v524, 0
    %v536 = vsel %vm231, %v525, 0
    %v539 = vsel %vm231, %v526, 0
    %v542 = vsel %vm231, %v527, 0
    %v545 = vsel %vm231, %v528, 0
    %547 = vmatpush.msra.mxu0 0.0
    %548 = vmatpush.msra.mxu0 0.0
    %549 = vmatpush.msra.mxu0 0.0
    %550 = vmatpush.msra.mxu0 0.0
    %551 = vmatpush.msra.mxu0 0.0
    %552 = vmatpush.msra.mxu0 0.0
    %553 = vmatpush.msra.mxu0 %v223
    %554 = vmatpush.msra.mxu0 %v221
    %555 = vmatpush.msra.mxu0 %v219
    %556 = vmatpush.msra.mxu0 %v217
    %557 = vmatpush.msra.mxu0 %v215
    %558 = vmatpush.msra.mxu0 %v213
    %559 = vmatpush.msra.mxu0 %v211
    %560 = vmatpush.msra.mxu0 %v209
    %561 = vmatpush.msra.mxu0 %v207
    %562 = vmatpush.msra.mxu0 %v205
    %563 = vmatmul.f32.gmra.mxu0 %v530
    %v564 = vpop.f32.mrf.mxu0
    %v565 = vadd.f32 0.0, %v564
    %566 = vmatmul.f32.gmra.mxu0 %v533
    %v567 = vpop.f32.mrf.mxu0
    %v568 = vadd.f32 0.0, %v567
    %569 = vmatmul.f32.gmra.mxu0 %v536
    %v570 = vpop.f32.mrf.mxu0
    %v571 = vadd.f32 0.0, %v570
    %572 = vmatmul.f32.gmra.mxu0 %v539
    %v573 = vpop.f32.mrf.mxu0
    %v574 = vadd.f32 0.0, %v573
    %575 = vmatmul.f32.gmra.mxu0 %v542
    %v576 = vpop.f32.mrf.mxu0
    %v577 = vadd.f32 0.0, %v576
    %578 = vmatmul.f32.gmra.mxu0 %v545
    %v579 = vpop.f32.mrf.mxu0
    %v580 = vadd.f32 0.0, %v579
    %581 = vdwg.mxu0
    %582 = vmatpush.msra.mxu0 0.0
    %583 = vmatpush.msra.mxu0 0.0
    %584 = vmatpush.msra.mxu0 0.0
    %585 = vmatpush.msra.mxu0 0.0
    %586 = vmatpush.msra.mxu0 0.0
    %587 = vmatpush.msra.mxu0 0.0
    %588 = vmatpush.msra.mxu0 %v224
    %589 = vmatpush.msra.mxu0 %v222
    %590 = vmatpush.msra.mxu0 %v220
    %591 = vmatpush.msra.mxu0 %v218
    %592 = vmatpush.msra.mxu0 %v216
    %593 = vmatpush.msra.mxu0 %v214
    %594 = vmatpush.msra.mxu0 %v212
    %595 = vmatpush.msra.mxu0 %v210
    %596 = vmatpush.msra.mxu0 %v208
    %597 = vmatpush.msra.mxu0 %v206
    %598 = vmatmul.f32.gmra.mxu0 %v530
    %v599 = vpop.f32.mrf.mxu0
    %v600 = vadd.f32 0.0, %v599
    %601 = vmatmul.f32.gmra.mxu0 %v533
    %v602 = vpop.f32.mrf.mxu0
    %v603 = vadd.f32 0.0, %v602
    %604 = vmatmul.f32.gmra.mxu0 %v536
    %v605 = vpop.f32.mrf.mxu0
    %v606 = vadd.f32 0.0, %v605
    %607 = vmatmul.f32.gmra.mxu0 %v539
    %v608 = vpop.f32.mrf.mxu0
    %v609 = vadd.f32 0.0, %v608
    %610 = vmatmul.f32.gmra.mxu0 %v542
    %v611 = vpop.f32.mrf.mxu0
    %v612 = vadd.f32 0.0, %v611
    %613 = vmatmul.f32.gmra.mxu0 %v545
    %v614 = vpop.f32.mrf.mxu0
    %v615 = vadd.f32 0.0, %v614
    %616 = vdwg.mxu0
    %617 = vrot.lane.b32.xlu0 %v565, 113
    %v618 = vpop.permute.xlu0 %617
    %619 = vrot.lane.b32.xlu0 %v568, 113
    %v620 = vpop.permute.xlu0 %619
    %621 = vrot.lane.b32.xlu0 %v600, 113
    %v622 = vpop.permute.xlu0 %621
    %623 = vrot.lane.b32.xlu0 %v603, 113
    %v624 = vpop.permute.xlu0 %623
    %vm625 = vcmp.lt.s32.totalorder %v31, 113
    %v626 = vsel %vm625, %v618, %v622
    %v627 = vsel %vm625, %v620, %v624
    %v628 = vsel %vm625, %v622, %v618
    %v629 = vsel %vm625, %v624, %v620
    %v630 = vmul.f32 %v45, %v51
    %v631 = vmul.f32 %v46, %v52
    %v632 = vmul.f32 %v626, %v630
    %v633 = vmul.f32 %v628, %v631
    %v634 = vmul.f32 %v627, %v630
    %v635 = vmul.f32 %v629, %v631
    %v636 = vadd.f32 %v519, %v632
    %v637 = vadd.f32 %v520, %v633
    %v638 = vadd.f32 %v521, %v634
    %v639 = vadd.f32 %v522, %v635
    %640 = vrot.lane.b32.xlu0 %v571, 112
    %v641 = vpop.permute.xlu0 %640
    %642 = vrot.lane.b32.xlu0 %v574, 112
    %v643 = vpop.permute.xlu0 %642
    %644 = vrot.lane.b32.xlu0 %v606, 112
    %v645 = vpop.permute.xlu0 %644
    %646 = vrot.lane.b32.xlu0 %v609, 112
    %v647 = vpop.permute.xlu0 %646
    %vm648 = vcmp.lt.s32.totalorder %v31, 112
    %v649 = vsel %vm648, %v641, %v645
    %v650 = vsel %vm648, %v643, %v647
    %v651 = vsel %vm648, %v645, %v641
    %v652 = vsel %vm648, %v647, %v643
    %v653 = vmul.f32 %v649, %v45
    %v654 = vmul.f32 %v651, %v46
    %v655 = vmul.f32 %v650, %v45
    %v656 = vmul.f32 %v652, %v46
    %v657 = vadd.f32 %v636, %v653
    %v658 = vadd.f32 %v637, %v654
    %v659 = vadd.f32 %v638, %v655
    %v660 = vadd.f32 %v639, %v656
    %661 = vrot.lane.b32.xlu0 %v577, 111
    %v662 = vpop.permute.xlu0 %661
    %663 = vrot.lane.b32.xlu0 %v580, 111
    %v664 = vpop.permute.xlu0 %663
    %665 = vrot.lane.b32.xlu0 %v612, 111
    %v666 = vpop.permute.xlu0 %665
    %667 = vrot.lane.b32.xlu0 %v615, 111
    %v668 = vpop.permute.xlu0 %667
    %vm669 = vcmp.lt.s32.totalorder %v31, 111
    %v670 = vsel %vm669, %v662, %v666
    %v671 = vsel %vm669, %v664, %v668
    %v672 = vsel %vm669, %v666, %v662
    %v673 = vsel %vm669, %v668, %v664
    %v674 = vmul.f32 %v45, %v57
    %v675 = vmul.f32 %v46, %v58
    %v676 = vmul.f32 %v670, %v674
    %v677 = vmul.f32 %v672, %v675
    %v678 = vmul.f32 %v671, %v674
    %v679 = vmul.f32 %v673, %v675
    %v680 = vadd.f32 %v657, %v676
    %v681 = vadd.f32 %v658, %v677
    %v682 = vadd.f32 %v659, %v678
    %v683 = vadd.f32 %v660, %v679
    %685 = vst [vmem:[#allocation1] ss:$2 sm:$0xff] %v69
    %v686 = vld.sshfl [vmem:[#allocation1] sm:$0xff pattern:$0x75316420]
    %v687 = vld.sshfl [vmem:[#allocation1 + $0x8] sm:$0xff pattern:$0x75316420]
    %v694 = vrot.slane %v680, 4
    %v695 = vrot.slane %v681, 4
    %v696 = vrot.slane %v682, 4
    %v697 = vsel %vm106, %v694, %v696
    %v698 = vrot.slane %v683, 4
    %v699 = vsel %vm106, %v695, %v698
    %v706 = vsel %vm106, %v686, %v694
    %v707 = vsel %vm106, %v687, %v695
    %708 = vst [vmem:[%s3] sm:$0xff] %v706
    %709 = vst [vmem:[%s3 + $0x8] sm:$0xff] %v707
    %710 = vst [vmem:[%s3 + $0x10] sm:$0xff] %v697
    %711 = vst [vmem:[%s3 + $0x18] sm:$0xff] %v699
    %712 = vst [vmem:[%s3 + $0x20] sm:$0xf] %v696
    %713 = vst [vmem:[%s3 + $0x28] sm:$0xf] %v698
    %s714 = scalar_lea.vmem %s0, 8
    %v715 = vld [vmem:[%s714] sm:$0xff]
    %v716 = vmax.f32 %v715, 0.0
    %718 = vst [vmem:[#allocation1] ss:$2 sm:$0xff] %v716
    %v719 = vld.sshfl [vmem:[#allocation1] sm:$0xff pattern:$0x75316420]
    %v720 = vld.sshfl [vmem:[#allocation1 + $0x8] sm:$0xff pattern:$0x75316420]
    %v721 = vsel %vm106, %v719, 0
    %v723 = vsel %vm106, %v720, 0
    %725 = vmatpush.msra.mxu0 0.0
    %726 = vmatpush.msra.mxu0 0.0
    %727 = vmatpush.msra.mxu0 0.0
    %728 = vmatpush.msra.mxu0 0.0
    %729 = vmatpush.msra.mxu0 0.0
    %730 = vmatpush.msra.mxu0 0.0
    %731 = vmatpush.msra.mxu0 0.0
    %732 = vmatpush.msra.mxu0 0.0
    %733 = vmatpush.msra.mxu0 0.0
    %734 = vmatpush.msra.mxu0 0.0
    %735 = vmatpush.msra.mxu0 0.0
    %736 = vmatpush.msra.mxu0 0.0
    %737 = vmatpush.msra.mxu0 0.0
    %738 = vmatpush.msra.mxu0 0.0
    %739 = vmatpush.msra.mxu0 0.0
    %740 = vmatpush.msra.mxu0 %v721
    %741 = vmatmul.f32.gmra.mxu0 %v77
    %v742 = vpop.f32.mrf.mxu0
    %v743 = vadd.f32 0.0, %v742
    %744 = vmatmul.f32.gmra.mxu0 %v80
    %v745 = vpop.f32.mrf.mxu0
    %v746 = vadd.f32 0.0, %v745
    %747 = vmatmul.f32.gmra.mxu0 %v83
    %v748 = vpop.f32.mrf.mxu0
    %v749 = vadd.f32 0.0, %v748
    %750 = vmatmul.f32.gmra.mxu0 %v86
    %v751 = vpop.f32.mrf.mxu0
    %v752 = vadd.f32 0.0, %v751
    %753 = vmatmul.f32.gmra.mxu0 %v89
    %v754 = vpop.f32.mrf.mxu0
    %v755 = vadd.f32 0.0, %v754
    %756 = vmatmul.f32.gmra.mxu0 %v92
    %v757 = vpop.f32.mrf.mxu0
    %v758 = vadd.f32 0.0, %v757
    %759 = vmatmul.f32.gmra.mxu0 %v95
    %v760 = vpop.f32.mrf.mxu0
    %v761 = vadd.f32 0.0, %v760
    %762 = vmatmul.f32.gmra.mxu0 %v98
    %v763 = vpop.f32.mrf.mxu0
    %v764 = vadd.f32 0.0, %v763
    %765 = vmatmul.f32.gmra.mxu0 %v101
    %v766 = vpop.f32.mrf.mxu0
    %v767 = vadd.f32 0.0, %v766
    %768 = vmatmul.f32.gmra.mxu0 %v104
    %v769 = vpop.f32.mrf.mxu0
    %v770 = vadd.f32 0.0, %v769
    %771 = vdwg.mxu0
    %772 = vmatpush.msra.mxu0 0.0
    %773 = vmatpush.msra.mxu0 0.0
    %774 = vmatpush.msra.mxu0 0.0
    %775 = vmatpush.msra.mxu0 0.0
    %776 = vmatpush.msra.mxu0 0.0
    %777 = vmatpush.msra.mxu0 0.0
    %778 = vmatpush.msra.mxu0 0.0
    %779 = vmatpush.msra.mxu0 0.0
    %780 = vmatpush.msra.mxu0 0.0
    %781 = vmatpush.msra.mxu0 0.0
    %782 = vmatpush.msra.mxu0 0.0
    %783 = vmatpush.msra.mxu0 0.0
    %784 = vmatpush.msra.mxu0 0.0
    %785 = vmatpush.msra.mxu0 0.0
    %786 = vmatpush.msra.mxu0 0.0
    %787 = vmatpush.msra.mxu0 %v723
    %788 = vmatmul.f32.gmra.mxu0 %v77
    %v789 = vpop.f32.mrf.mxu0
    %v790 = vadd.f32 0.0, %v789
    %791 = vmatmul.f32.gmra.mxu0 %v80
    %v792 = vpop.f32.mrf.mxu0
    %v793 = vadd.f32 0.0, %v792
    %794 = vmatmul.f32.gmra.mxu0 %v83
    %v795 = vpop.f32.mrf.mxu0
    %v796 = vadd.f32 0.0, %v795
    %797 = vmatmul.f32.gmra.mxu0 %v86
    %v798 = vpop.f32.mrf.mxu0
    %v799 = vadd.f32 0.0, %v798
    %800 = vmatmul.f32.gmra.mxu0 %v89
    %v801 = vpop.f32.mrf.mxu0
    %v802 = vadd.f32 0.0, %v801
    %803 = vmatmul.f32.gmra.mxu0 %v92
    %v804 = vpop.f32.mrf.mxu0
    %v805 = vadd.f32 0.0, %v804
    %806 = vmatmul.f32.gmra.mxu0 %v95
    %v807 = vpop.f32.mrf.mxu0
    %v808 = vadd.f32 0.0, %v807
    %809 = vmatmul.f32.gmra.mxu0 %v98
    %v810 = vpop.f32.mrf.mxu0
    %v811 = vadd.f32 0.0, %v810
    %812 = vmatmul.f32.gmra.mxu0 %v101
    %v813 = vpop.f32.mrf.mxu0
    %v814 = vadd.f32 0.0, %v813
    %815 = vmatmul.f32.gmra.mxu0 %v104
    %v816 = vpop.f32.mrf.mxu0
    %v817 = vadd.f32 0.0, %v816
    %818 = vdwg.mxu0
    %v819 = vmax.f32 %v743, 0.0
    %v820 = vmax.f32 %v790, 0.0
    %v821 = vmax.f32 %v746, 0.0
    %v822 = vmax.f32 %v793, 0.0
    %v823 = vmax.f32 %v749, 0.0
    %v824 = vmax.f32 %v796, 0.0
    %v825 = vmax.f32 %v752, 0.0
    %v826 = vmax.f32 %v799, 0.0
    %v827 = vmax.f32 %v755, 0.0
    %v828 = vmax.f32 %v802, 0.0
    %v829 = vmax.f32 %v758, 0.0
    %v830 = vmax.f32 %v805, 0.0
    %v831 = vmax.f32 %v761, 0.0
    %v832 = vmax.f32 %v808, 0.0
    %v833 = vmax.f32 %v764, 0.0
    %v834 = vmax.f32 %v811, 0.0
    %v835 = vmax.f32 %v767, 0.0
    %v836 = vmax.f32 %v814, 0.0
    %v837 = vmax.f32 %v770, 0.0
    %v838 = vmax.f32 %v817, 0.0
    %v839 = vld [vmem:[#allocation2] sm:$0xff]
    %v840 = vld [vmem:[#allocation2 + $0x8] sm:$0xff]
    %v841 = vld [vmem:[#allocation2 + $0x10] sm:$0xff]
    %v842 = vld [vmem:[#allocation2 + $0x18] sm:$0xff]
    %v843 = vld [vmem:[#allocation2 + $0x20] sm:$0xff]
    %v844 = vld [vmem:[#allocation2 + $0x28] sm:$0xff]
    %v846 = vsel %vm231, %v839, 0
    %v849 = vsel %vm231, %v840, 0
    %v852 = vsel %vm231, %v841, 0
    %v855 = vsel %vm231, %v842, 0
    %v858 = vsel %vm231, %v843, 0
    %v861 = vsel %vm231, %v844, 0
    %863 = vmatpush.msra.mxu0 0.0
    %864 = vmatpush.msra.mxu0 0.0
    %865 = vmatpush.msra.mxu0 0.0
    %866 = vmatpush.msra.mxu0 0.0
    %867 = vmatpush.msra.mxu0 0.0
    %868 = vmatpush.msra.mxu0 0.0
    %869 = vmatpush.msra.mxu0 %v837
    %870 = vmatpush.msra.mxu0 %v835
    %871 = vmatpush.msra.mxu0 %v833
    %872 = vmatpush.msra.mxu0 %v831
    %873 = vmatpush.msra.mxu0 %v829
    %874 = vmatpush.msra.mxu0 %v827
    %875 = vmatpush.msra.mxu0 %v825
    %876 = vmatpush.msra.mxu0 %v823
    %877 = vmatpush.msra.mxu0 %v821
    %878 = vmatpush.msra.mxu0 %v819
    %879 = vmatmul.f32.gmra.mxu0 %v846
    %v880 = vpop.f32.mrf.mxu0
    %v881 = vadd.f32 0.0, %v880
    %882 = vmatmul.f32.gmra.mxu0 %v849
    %v883 = vpop.f32.mrf.mxu0
    %v884 = vadd.f32 0.0, %v883
    %885 = vmatmul.f32.gmra.mxu0 %v852
    %v886 = vpop.f32.mrf.mxu0
    %v887 = vadd.f32 0.0, %v886
    %888 = vmatmul.f32.gmra.mxu0 %v855
    %v889 = vpop.f32.mrf.mxu0
    %v890 = vadd.f32 0.0, %v889
    %891 = vmatmul.f32.gmra.mxu0 %v858
    %v892 = vpop.f32.mrf.mxu0
    %v893 = vadd.f32 0.0, %v892
    %894 = vmatmul.f32.gmra.mxu0 %v861
    %v895 = vpop.f32.mrf.mxu0
    %v896 = vadd.f32 0.0, %v895
    %897 = vdwg.mxu0
    %898 = vmatpush.msra.mxu0 0.0
    %899 = vmatpush.msra.mxu0 0.0
    %900 = vmatpush.msra.mxu0 0.0
    %901 = vmatpush.msra.mxu0 0.0
    %902 = vmatpush.msra.mxu0 0.0
    %903 = vmatpush.msra.mxu0 0.0
    %904 = vmatpush.msra.mxu0 %v838
    %905 = vmatpush.msra.mxu0 %v836
    %906 = vmatpush.msra.mxu0 %v834
    %907 = vmatpush.msra.mxu0 %v832
    %908 = vmatpush.msra.mxu0 %v830
    %909 = vmatpush.msra.mxu0 %v828
    %910 = vmatpush.msra.mxu0 %v826
    %911 = vmatpush.msra.mxu0 %v824
    %912 = vmatpush.msra.mxu0 %v822
    %913 = vmatpush.msra.mxu0 %v820
    %914 = vmatmul.f32.gmra.mxu0 %v846
    %v915 = vpop.f32.mrf.mxu0
    %v916 = vadd.f32 0.0, %v915
    %917 = vmatmul.f32.gmra.mxu0 %v849
    %v918 = vpop.f32.mrf.mxu0
    %v919 = vadd.f32 0.0, %v918
    %920 = vmatmul.f32.gmra.mxu0 %v852
    %v921 = vpop.f32.mrf.mxu0
    %v922 = vadd.f32 0.0, %v921
    %923 = vmatmul.f32.gmra.mxu0 %v855
    %v924 = vpop.f32.mrf.mxu0
    %v925 = vadd.f32 0.0, %v924
    %926 = vmatmul.f32.gmra.mxu0 %v858
    %v927 = vpop.f32.mrf.mxu0
    %v928 = vadd.f32 0.0, %v927
    %929 = vmatmul.f32.gmra.mxu0 %v861
    %v930 = vpop.f32.mrf.mxu0
    %v931 = vadd.f32 0.0, %v930
    %932 = vdwg.mxu0
    %933 = vrot.lane.b32.xlu0 %v881, 17
    %v934 = vpop.permute.xlu0 %933
    %935 = vrot.lane.b32.xlu0 %v884, 17
    %v936 = vpop.permute.xlu0 %935
    %937 = vrot.lane.b32.xlu0 %v916, 17
    %v938 = vpop.permute.xlu0 %937
    %939 = vrot.lane.b32.xlu0 %v919, 17
    %v940 = vpop.permute.xlu0 %939
    %v941 = vsel %vm328, %v934, %v938
    %v942 = vsel %vm328, %v936, %v940
    %v943 = vsel %vm328, %v938, %v934
    %v944 = vsel %vm328, %v940, %v936
    %v945 = vmul.f32 %v943, %v333
    %v946 = vmul.f32 %v941, %v334
    %v947 = vmul.f32 %v944, %v333
    %v948 = vmul.f32 %v942, %v334
    %949 = vrot.lane.b32.xlu0 %v887, 16
    %v950 = vpop.permute.xlu0 %949
    %951 = vrot.lane.b32.xlu0 %v890, 16
    %v952 = vpop.permute.xlu0 %951
    %953 = vrot.lane.b32.xlu0 %v922, 16
    %v954 = vpop.permute.xlu0 %953
    %955 = vrot.lane.b32.xlu0 %v925, 16
    %v956 = vpop.permute.xlu0 %955
    %v957 = vsel %vm347, %v950, %v954
    %v958 = vsel %vm347, %v952, %v956
    %v959 = vsel %vm347, %v954, %v950
    %v960 = vsel %vm347, %v956, %v952
    %v961 = vmul.f32 %v959, %v39
    %v962 = vmul.f32 %v957, %v40
    %v963 = vmul.f32 %v960, %v39
    %v964 = vmul.f32 %v958, %v40
    %v965 = vadd.f32 %v945, %v961
    %v966 = vadd.f32 %v946, %v962
    %v967 = vadd.f32 %v947, %v963
    %v968 = vadd.f32 %v948, %v964
    %969 = vrot.lane.b32.xlu0 %v893, 15
    %v970 = vpop.permute.xlu0 %969
    %971 = vrot.lane.b32.xlu0 %v896, 15
    %v972 = vpop.permute.xlu0 %971
    %973 = vrot.lane.b32.xlu0 %v928, 15
    %v974 = vpop.permute.xlu0 %973
    %975 = vrot.lane.b32.xlu0 %v931, 15
    %v976 = vpop.permute.xlu0 %975
    %v977 = vsel %vm368, %v970, %v974
    %v978 = vsel %vm368, %v972, %v976
    %v979 = vsel %vm368, %v974, %v970
    %v980 = vsel %vm368, %v976, %v972
    %v981 = vmul.f32 %v979, %v373
    %v982 = vmul.f32 %v977, %v374
    %v983 = vmul.f32 %v980, %v373
    %v984 = vmul.f32 %v978, %v374
    %v985 = vadd.f32 %v965, %v981
    %v986 = vadd.f32 %v966, %v982
    %v987 = vadd.f32 %v967, %v983
    %v988 = vadd.f32 %v968, %v984
    %v989 = vld [vmem:[#allocation2 + $0x30] sm:$0xff]
    %v990 = vld [vmem:[#allocation2 + $0x38] sm:$0xff]
    %v991 = vld [vmem:[#allocation2 + $0x40] sm:$0xff]
    %v992 = vld [vmem:[#allocation2 + $0x48] sm:$0xff]
    %v993 = vld [vmem:[#allocation2 + $0x50] sm:$0xff]
    %v994 = vld [vmem:[#allocation2 + $0x58] sm:$0xff]
    %v996 = vsel %vm231, %v989, 0
    %v999 = vsel %vm231, %v990, 0
    %v1002 = vsel %vm231, %v991, 0
    %v1005 = vsel %vm231, %v992, 0
    %v1008 = vsel %vm231, %v993, 0
    %v1011 = vsel %vm231, %v994, 0
    %1013 = vmatpush.msra.mxu0 0.0
    %1014 = vmatpush.msra.mxu0 0.0
    %1015 = vmatpush.msra.mxu0 0.0
    %1016 = vmatpush.msra.mxu0 0.0
    %1017 = vmatpush.msra.mxu0 0.0
    %1018 = vmatpush.msra.mxu0 0.0
    %1019 = vmatpush.msra.mxu0 %v837
    %1020 = vmatpush.msra.mxu0 %v835
    %1021 = vmatpush.msra.mxu0 %v833
    %1022 = vmatpush.msra.mxu0 %v831
    %1023 = vmatpush.msra.mxu0 %v829
    %1024 = vmatpush.msra.mxu0 %v827
    %1025 = vmatpush.msra.mxu0 %v825
    %1026 = vmatpush.msra.mxu0 %v823
    %1027 = vmatpush.msra.mxu0 %v821
    %1028 = vmatpush.msra.mxu0 %v819
    %1029 = vmatmul.f32.gmra.mxu0 %v996
    %v1030 = vpop.f32.mrf.mxu0
    %v1031 = vadd.f32 0.0, %v1030
    %1032 = vmatmul.f32.gmra.mxu0 %v999
    %v1033 = vpop.f32.mrf.mxu0
    %v1034 = vadd.f32 0.0, %v1033
    %1035 = vmatmul.f32.gmra.mxu0 %v1002
    %v1036 = vpop.f32.mrf.mxu0
    %v1037 = vadd.f32 0.0, %v1036
    %1038 = vmatmul.f32.gmra.mxu0 %v1005
    %v1039 = vpop.f32.mrf.mxu0
    %v1040 = vadd.f32 0.0, %v1039
    %1041 = vmatmul.f32.gmra.mxu0 %v1008
    %v1042 = vpop.f32.mrf.mxu0
    %v1043 = vadd.f32 0.0, %v1042
    %1044 = vmatmul.f32.gmra.mxu0 %v1011
    %v1045 = vpop.f32.mrf.mxu0
    %v1046 = vadd.f32 0.0, %v1045
    %1047 = vdwg.mxu0
    %1048 = vmatpush.msra.mxu0 0.0
    %1049 = vmatpush.msra.mxu0 0.0
    %1050 = vmatpush.msra.mxu0 0.0
    %1051 = vmatpush.msra.mxu0 0.0
    %1052 = vmatpush.msra.mxu0 0.0
    %1053 = vmatpush.msra.mxu0 0.0
    %1054 = vmatpush.msra.mxu0 %v838
    %1055 = vmatpush.msra.mxu0 %v836
    %1056 = vmatpush.msra.mxu0 %v834
    %1057 = vmatpush.msra.mxu0 %v832
    %1058 = vmatpush.msra.mxu0 %v830
    %1059 = vmatpush.msra.mxu0 %v828
    %1060 = vmatpush.msra.mxu0 %v826
    %1061 = vmatpush.msra.mxu0 %v824
    %1062 = vmatpush.msra.mxu0 %v822
    %1063 = vmatpush.msra.mxu0 %v820
    %1064 = vmatmul.f32.gmra.mxu0 %v996
    %v1065 = vpop.f32.mrf.mxu0
    %v1066 = vadd.f32 0.0, %v1065
    %1067 = vmatmul.f32.gmra.mxu0 %v999
    %v1068 = vpop.f32.mrf.mxu0
    %v1069 = vadd.f32 0.0, %v1068
    %1070 = vmatmul.f32.gmra.mxu0 %v1002
    %v1071 = vpop.f32.mrf.mxu0
    %v1072 = vadd.f32 0.0, %v1071
    %1073 = vmatmul.f32.gmra.mxu0 %v1005
    %v1074 = vpop.f32.mrf.mxu0
    %v1075 = vadd.f32 0.0, %v1074
    %1076 = vmatmul.f32.gmra.mxu0 %v1008
    %v1077 = vpop.f32.mrf.mxu0
    %v1078 = vadd.f32 0.0, %v1077
    %1079 = vmatmul.f32.gmra.mxu0 %v1011
    %v1080 = vpop.f32.mrf.mxu0
    %v1081 = vadd.f32 0.0, %v1080
    %1082 = vdwg.mxu0
    %1083 = vrot.lane.b32.xlu0 %v1031, 1
    %v1084 = vpop.permute.xlu0 %1083
    %1085 = vrot.lane.b32.xlu0 %v1034, 1
    %v1086 = vpop.permute.xlu0 %1085
    %1087 = vrot.lane.b32.xlu0 %v1066, 1
    %v1088 = vpop.permute.xlu0 %1087
    %1089 = vrot.lane.b32.xlu0 %v1069, 1
    %v1090 = vpop.permute.xlu0 %1089
    %v1091 = vsel %vm485, %v1084, %v1088
    %v1092 = vsel %vm485, %v1086, %v1090
    %v1093 = vsel %vm485, %v1088, %v1084
    %v1094 = vsel %vm485, %v1090, %v1086
    %v1095 = vmul.f32 %v1093, %v51
    %v1096 = vmul.f32 %v1091, %v52
    %v1097 = vmul.f32 %v1094, %v51
    %v1098 = vmul.f32 %v1092, %v52
    %v1099 = vadd.f32 %v985, %v1095
    %v1100 = vadd.f32 %v986, %v1096
    %v1101 = vadd.f32 %v987, %v1097
    %v1102 = vadd.f32 %v988, %v1098
    %v1103 = vadd.f32 %v1099, %v1037
    %v1104 = vadd.f32 %v1100, %v1072
    %v1105 = vadd.f32 %v1101, %v1040
    %v1106 = vadd.f32 %v1102, %v1075
    %1107 = vrot.lane.b32.xlu0 %v1043, 127
    %v1108 = vpop.permute.xlu0 %1107
    %1109 = vrot.lane.b32.xlu0 %v1046, 127
    %v1110 = vpop.permute.xlu0 %1109
    %1111 = vrot.lane.b32.xlu0 %v1078, 127
    %v1112 = vpop.permute.xlu0 %1111
    %1113 = vrot.lane.b32.xlu0 %v1081, 127
    %v1114 = vpop.permute.xlu0 %1113
    %v1115 = vsel %vm510, %v1108, %v1112
    %v1116 = vsel %vm510, %v1110, %v1114
    %v1117 = vsel %vm510, %v1112, %v1108
    %v1118 = vsel %vm510, %v1114, %v1110
    %v1119 = vmul.f32 %v1115, %v57
    %v1120 = vmul.f32 %v1117, %v58
    %v1121 = vmul.f32 %v1116, %v57
    %v1122 = vmul.f32 %v1118, %v58
    %v1123 = vadd.f32 %v1103, %v1119
    %v1124 = vadd.f32 %v1104, %v1120
    %v1125 = vadd.f32 %v1105, %v1121
    %v1126 = vadd.f32 %v1106, %v1122
    %v1127 = vld [vmem:[#allocation2 + $0x60] sm:$0xff]
    %v1128 = vld [vmem:[#allocation2 + $0x68] sm:$0xff]
    %v1129 = vld [vmem:[#allocation2 + $0x70] sm:$0xff]
    %v1130 = vld [vmem:[#allocation2 + $0x78] sm:$0xff]
    %v1131 = vld [vmem:[#allocation2 + $0x80] sm:$0xff]
    %v1132 = vld [vmem:[#allocation2 + $0x88] sm:$0xff]
    %v1134 = vsel %vm231, %v1127, 0
    %v1137 = vsel %vm231, %v1128, 0
    %v1140 = vsel %vm231, %v1129, 0
    %v1143 = vsel %vm231, %v1130, 0
    %v1146 = vsel %vm231, %v1131, 0
    %v1149 = vsel %vm231, %v1132, 0
    %1151 = vmatpush.msra.mxu0 0.0
    %1152 = vmatpush.msra.mxu0 0.0
    %1153 = vmatpush.msra.mxu0 0.0
    %1154 = vmatpush.msra.mxu0 0.0
    %1155 = vmatpush.msra.mxu0 0.0
    %1156 = vmatpush.msra.mxu0 0.0
    %1157 = vmatpush.msra.mxu0 %v837
    %1158 = vmatpush.msra.mxu0 %v835
    %1159 = vmatpush.msra.mxu0 %v833
    %1160 = vmatpush.msra.mxu0 %v831
    %1161 = vmatpush.msra.mxu0 %v829
    %1162 = vmatpush.msra.mxu0 %v827
    %1163 = vmatpush.msra.mxu0 %v825
    %1164 = vmatpush.msra.mxu0 %v823
    %1165 = vmatpush.msra.mxu0 %v821
    %1166 = vmatpush.msra.mxu0 %v819
    %1167 = vmatmul.f32.gmra.mxu0 %v1134
    %v1168 = vpop.f32.mrf.mxu0
    %v1169 = vadd.f32 0.0, %v1168
    %1170 = vmatmul.f32.gmra.mxu0 %v1137
    %v1171 = vpop.f32.mrf.mxu0
    %v1172 = vadd.f32 0.0, %v1171
    %1173 = vmatmul.f32.gmra.mxu0 %v1140
    %v1174 = vpop.f32.mrf.mxu0
    %v1175 = vadd.f32 0.0, %v1174
    %1176 = vmatmul.f32.gmra.mxu0 %v1143
    %v1177 = vpop.f32.mrf.mxu0
    %v1178 = vadd.f32 0.0, %v1177
    %1179 = vmatmul.f32.gmra.mxu0 %v1146
    %v1180 = vpop.f32.mrf.mxu0
    %v1181 = vadd.f32 0.0, %v1180
    %1182 = vmatmul.f32.gmra.mxu0 %v1149
    %v1183 = vpop.f32.mrf.mxu0
    %v1184 = vadd.f32 0.0, %v1183
    %1185 = vdwg.mxu0
    %1186 = vmatpush.msra.mxu0 0.0
    %1187 = vmatpush.msra.mxu0 0.0
    %1188 = vmatpush.msra.mxu0 0.0
    %1189 = vmatpush.msra.mxu0 0.0
    %1190 = vmatpush.msra.mxu0 0.0
    %1191 = vmatpush.msra.mxu0 0.0
    %1192 = vmatpush.msra.mxu0 %v838
    %1193 = vmatpush.msra.mxu0 %v836
    %1194 = vmatpush.msra.mxu0 %v834
    %1195 = vmatpush.msra.mxu0 %v832
    %1196 = vmatpush.msra.mxu0 %v830
    %1197 = vmatpush.msra.mxu0 %v828
    %1198 = vmatpush.msra.mxu0 %v826
    %1199 = vmatpush.msra.mxu0 %v824
    %1200 = vmatpush.msra.mxu0 %v822
    %1201 = vmatpush.msra.mxu0 %v820
    %1202 = vmatmul.f32.gmra.mxu0 %v1134
    %v1203 = vpop.f32.mrf.mxu0
    %v1204 = vadd.f32 0.0, %v1203
    %1205 = vmatmul.f32.gmra.mxu0 %v1137
    %v1206 = vpop.f32.mrf.mxu0
    %v1207 = vadd.f32 0.0, %v1206
    %1208 = vmatmul.f32.gmra.mxu0 %v1140
    %v1209 = vpop.f32.mrf.mxu0
    %v1210 = vadd.f32 0.0, %v1209
    %1211 = vmatmul.f32.gmra.mxu0 %v1143
    %v1212 = vpop.f32.mrf.mxu0
    %v1213 = vadd.f32 0.0, %v1212
    %1214 = vmatmul.f32.gmra.mxu0 %v1146
    %v1215 = vpop.f32.mrf.mxu0
    %v1216 = vadd.f32 0.0, %v1215
    %1217 = vmatmul.f32.gmra.mxu0 %v1149
    %v1218 = vpop.f32.mrf.mxu0
    %v1219 = vadd.f32 0.0, %v1218
    %1220 = vdwg.mxu0
    %1221 = vrot.lane.b32.xlu0 %v1169, 113
    %v1222 = vpop.permute.xlu0 %1221
    %1223 = vrot.lane.b32.xlu0 %v1172, 113
    %v1224 = vpop.permute.xlu0 %1223
    %1225 = vrot.lane.b32.xlu0 %v1204, 113
    %v1226 = vpop.permute.xlu0 %1225
    %1227 = vrot.lane.b32.xlu0 %v1207, 113
    %v1228 = vpop.permute.xlu0 %1227
    %v1229 = vsel %vm625, %v1222, %v1226
    %v1230 = vsel %vm625, %v1224, %v1228
    %v1231 = vsel %vm625, %v1226, %v1222
    %v1232 = vsel %vm625, %v1228, %v1224
    %v1233 = vmul.f32 %v1229, %v630
    %v1234 = vmul.f32 %v1231, %v631
    %v1235 = vmul.f32 %v1230, %v630
    %v1236 = vmul.f32 %v1232, %v631
    %v1237 = vadd.f32 %v1123, %v1233
    %v1238 = vadd.f32 %v1124, %v1234
    %v1239 = vadd.f32 %v1125, %v1235
    %v1240 = vadd.f32 %v1126, %v1236
    %1241 = vrot.lane.b32.xlu0 %v1175, 112
    %v1242 = vpop.permute.xlu0 %1241
    %1243 = vrot.lane.b32.xlu0 %v1178, 112
    %v1244 = vpop.permute.xlu0 %1243
    %1245 = vrot.lane.b32.xlu0 %v1210, 112
    %v1246 = vpop.permute.xlu0 %1245
    %1247 = vrot.lane.b32.xlu0 %v1213, 112
    %v1248 = vpop.permute.xlu0 %1247
    %v1249 = vsel %vm648, %v1242, %v1246
    %v1250 = vsel %vm648, %v1244, %v1248
    %v1251 = vsel %vm648, %v1246, %v1242
    %v1252 = vsel %vm648, %v1248, %v1244
    %v1253 = vmul.f32 %v1249, %v45
    %v1254 = vmul.f32 %v1251, %v46
    %v1255 = vmul.f32 %v1250, %v45
    %v1256 = vmul.f32 %v1252, %v46
    %v1257 = vadd.f32 %v1237, %v1253
    %v1258 = vadd.f32 %v1238, %v1254
    %v1259 = vadd.f32 %v1239, %v1255
    %v1260 = vadd.f32 %v1240, %v1256
    %1261 = vrot.lane.b32.xlu0 %v1181, 111
    %v1262 = vpop.permute.xlu0 %1261
    %1263 = vrot.lane.b32.xlu0 %v1184, 111
    %v1264 = vpop.permute.xlu0 %1263
    %1265 = vrot.lane.b32.xlu0 %v1216, 111
    %v1266 = vpop.permute.xlu0 %1265
    %1267 = vrot.lane.b32.xlu0 %v1219, 111
    %v1268 = vpop.permute.xlu0 %1267
    %v1269 = vsel %vm669, %v1262, %v1266
    %v1270 = vsel %vm669, %v1264, %v1268
    %v1271 = vsel %vm669, %v1266, %v1262
    %v1272 = vsel %vm669, %v1268, %v1264
    %v1273 = vmul.f32 %v1269, %v674
    %v1274 = vmul.f32 %v1271, %v675
    %v1275 = vmul.f32 %v1270, %v674
    %v1276 = vmul.f32 %v1272, %v675
    %v1277 = vadd.f32 %v1257, %v1273
    %v1278 = vadd.f32 %v1258, %v1274
    %v1279 = vadd.f32 %v1259, %v1275
    %v1280 = vadd.f32 %v1260, %v1276
    %1282 = vst [vmem:[#allocation1] ss:$2 sm:$0xff] %v715
    %v1283 = vld.sshfl [vmem:[#allocation1] sm:$0xff pattern:$0x75316420]
    %v1284 = vld.sshfl [vmem:[#allocation1 + $0x8] sm:$0xff pattern:$0x75316420]
    %v1291 = vrot.slane %v1277, 4
    %v1292 = vrot.slane %v1278, 4
    %v1293 = vrot.slane %v1279, 4
    %v1294 = vsel %vm106, %v1291, %v1293
    %v1295 = vrot.slane %v1280, 4
    %v1296 = vsel %vm106, %v1292, %v1295
    %v1303 = vsel %vm106, %v1283, %v1291
    %v1304 = vsel %vm106, %v1284, %v1292
    %s1305 = scalar_lea.vmem %s3, 48
    %1306 = vst [vmem:[%s1305] sm:$0xff] %v1303
    %1307 = vst [vmem:[%s1305 + $0x8] sm:$0xff] %v1304
    %1308 = vst [vmem:[%s1305 + $0x10] sm:$0xff] %v1294
    %1309 = vst [vmem:[%s1305 + $0x18] sm:$0xff] %v1296
    %1310 = vst [vmem:[%s1305 + $0x20] sm:$0xf] %v1293
    %1311 = vst [vmem:[%s1305 + $0x28] sm:$0xf] %v1295
    // Predicated region
    $region18: #{tpu_custom_call.1} parent=1 // pred_check
      _
    $region19: #{tpu_custom_call.1} parent=1 // pred_check_branch
      %1313 = sbr.rel (0) target = $region21
    $region20: #{tpu_custom_call.1} parent=1 // pred_region
      _
    $region21: #{tpu_custom_call.1} parent=1 // pred_fallthru
      _
    // Predicated region
    $region22: #{tpu_custom_call.1} parent=1 // pred_check
      _
    $region23: #{tpu_custom_call.1} parent=1 // pred_check_branch
      %1315 = sbr.rel (0) target = $region25
    $region24: #{tpu_custom_call.1} parent=1 // pred_region
      _
    $region25: #{tpu_custom_call.1} parent=1 // pred_fallthru
      _
    %1316 = vsyncpa [#allocation3], 1

</llo_original>
